<compile_context>
chip_gen: v6e
topology: v6e:2x2x1
jax: 0.10.0
libtpu: 0.0.40
codegen_flags: <defaults>
</compile_context>

<pallas_src>
import functools

import numpy as np
import jax
import jax.numpy as jnp
from jax import lax
from jax.experimental import pallas as pl
from jax.experimental.pallas import tpu as pltpu

FEATURE_DIM = 128     # feature_dim F (module default; lane-dense: F == 128)
SEQ_LEN = 64          # S (small demo size; multiple of 8 for tile alignment)
BATCH = 4             # N
NUM_LAYERS = 2        # num_layers
KERNEL_SIZE = 7
DILATION = 2
PAD = DILATION * (KERNEL_SIZE - 1) // 2        # = 6 ('same' padding, odd kernel)
HALO = ((PAD + 15) // 16) * 16                 # = 16: bf16-sublane-tile aligned halo
BN_EPS = 1e-5


def fold_bn_into_conv(w, b, gamma, beta, mean, var, eps=BN_EPS):
    """Fold inference BatchNorm1d into the preceding Conv1d.

    w: [L, K, F_in, F_out] (== torch weight[f_out, f_in, k] transposed), b: [L, F_out].
    Returns (w_cat [L, K*F_in, F_out], b_fold [L, F_out]) in float32.
    """
    scale = gamma * lax.rsqrt(var + eps)                   # [L, F_out]
    w_fold = w * scale[:, None, None, :]                   # scale output channel
    b_fold = (b - mean) * scale + beta
    L, K, Fi, Fo = w.shape
    # Row-major (k, f_in) flatten matches the lane-axis tap concatenation below.
    w_cat = w_fold.reshape(L, K * Fi, Fo)
    return w_cat, b_fold


def seq_cnn_kernel(x_ref, w_ref, b_ref, o_ref, *,
                   num_layers, kernel_size, dilation, halo):
    """All layers for one batch block per grid step. Conv+bias(+BN)+GELU+skip."""
    NB, S, F = x_ref.shape
    pad = dilation * (kernel_size - 1) // 2
    base = halo - pad                                      # tap-0 start inside halo'd buf
    x = x_ref[...].astype(jnp.float32)                     # residual path stays f32
    zhalo = jnp.zeros((NB, halo, F), jnp.bfloat16)         # tile-aligned zero halo

    for l in range(num_layers):                            # static unroll over layers
        # Cast to bf16 BEFORE the 7x tap expansion (halves data volume / vregs).
        xb = x.astype(jnp.bfloat16)
        xp = jnp.concatenate([zhalo, xb, zhalo], axis=1)   # [NB, S+2*halo, F] bf16
        taps = [xp[:, base + k * dilation: base + k * dilation + S, :]
                for k in range(kernel_size)]
        xcat = jnp.concatenate(taps, axis=-1)              # [NB, S, K*F] bf16

        # One MXU matmul per layer: [NB*S, K*F] x [K*F, F] (bf16 in, f32 acc).
        y = jnp.dot(xcat.reshape(NB * S, kernel_size * F), w_ref[l],
                    preferred_element_type=jnp.float32)    # [NB*S, F]

        y = y + b_ref[l:l + 1, :]                          # conv bias + folded BN (f32)
        y = jax.nn.gelu(y, approximate=True)               # tanh GELU -> EUP slot
        # Dropout: identity in inference mode.
        x = x + y.reshape(NB, S, F)                        # residual skip (f32)

    o_ref[...] = x.astype(o_ref.dtype)


def make_sequence_cnn(params, *, batch_block=None):
    w, b, gamma, beta, mean, var = params
    w_cat, b_fold = fold_bn_into_conv(w, b, gamma, beta, mean, var)
    w_cat = w_cat.astype(jnp.bfloat16)                     # bf16 MXU weights
    L, KF, F = w_cat.shape

    kernel = functools.partial(
        seq_cnn_kernel, num_layers=L, kernel_size=KERNEL_SIZE,
        dilation=DILATION, halo=HALO)

    def fwd(x_BSF):
        N, S, Fx = x_BSF.shape
        if batch_block is not None:
            nb = batch_block
        elif N >= 2 and N % 2 == 0:
            nb = N // 2          # >= 2 'parallel' grid steps (v7x dual TensorCore)
        else:
            nb = 1 if N > 1 else N
        assert N % nb == 0, "batch_block must divide N"
        grid = (N // nb,)

        # Advisory cost for XLA's scheduler around the custom call.
        cost = pl.CostEstimate(
            flops=2 * L * N * S * KERNEL_SIZE * Fx * Fx,
            transcendentals=L * N * S * Fx,
            bytes_accessed=(2 * N * S * Fx * 4            # x in + out (f32)
                            + L * KF * Fx * 2             # bf16 weights
                            + L * Fx * 4))                # f32 bias

        # Explicit VMEM budget: double-buffered f32 in/out blocks, resident
        # bf16 weights, plus headroom for the hidden 7x bf16 xcat expansion.
        io_bytes = 2 * 2 * nb * S * Fx * 4
        w_bytes = L * KF * Fx * 2 + L * Fx * 4
        xcat_bytes = nb * S * KERNEL_SIZE * Fx * 2
        vmem_limit = 2 * (io_bytes + w_bytes + 3 * xcat_bytes) + (4 << 20)
        vmem_limit = int(min(max(vmem_limit, 16 << 20), 64 << 20))

        return pl.pallas_call(
            kernel,
            out_shape=jax.ShapeDtypeStruct((N, S, Fx), x_BSF.dtype),
            grid_spec=pltpu.PrefetchScalarGridSpec(
                num_scalar_prefetch=0,
                grid=grid,
                in_specs=[
                    pl.BlockSpec((nb, S, Fx), lambda n: (n, 0, 0)),   # x block
                    pl.BlockSpec((L, KF, F), lambda n: (0, 0, 0)),    # folded W (resident)
                    pl.BlockSpec((L, F), lambda n: (0, 0)),           # folded b (resident)
                ],
                out_specs=pl.BlockSpec((nb, S, Fx), lambda n: (n, 0, 0)),
            ),
            compiler_params=pltpu.CompilerParams(
                dimension_semantics=("parallel",),
                vmem_limit_bytes=vmem_limit),
            cost_estimate=cost,
        )(x_BSF, w_cat, b_fold)

    return jax.jit(fwd)


def reference(x_BSF, params):
    """Pure-JAX reference doing the identical math (folded BN, bf16 taps/matmul)."""
    w, b, gamma, beta, mean, var = params
    w_cat, b_fold = fold_bn_into_conv(w, b, gamma, beta, mean, var)
    w_cat = w_cat.astype(jnp.bfloat16)
    x = x_BSF.astype(jnp.float32)
    N, S, F = x.shape
    for l in range(NUM_LAYERS):
        xb = x.astype(jnp.bfloat16)
        xp = jnp.pad(xb, ((0, 0), (PAD, PAD), (0, 0)))
        xcat = jnp.concatenate(
            [xp[:, k * DILATION:k * DILATION + S, :]
             for k in range(KERNEL_SIZE)], axis=-1)        # [N, S, K*F] bf16
        y = jnp.einsum('nsc,cf->nsf', xcat, w_cat[l],
                       preferred_element_type=jnp.float32)
        y = y + b_fold[l]
        y = jax.nn.gelu(y, approximate=True)
        x = x + y
    return x


if __name__ == "__main__":
    key = jax.random.PRNGKey(0)
    ks = jax.random.split(key, 7)
    F = FEATURE_DIM
    bound = 1.0 / float(np.sqrt(F * KERNEL_SIZE))   # PyTorch Conv1d init range

    # w[l, k, f_in, f_out] == torch_conv.weight[f_out, f_in, k] of layer l.
    w = jax.random.uniform(ks[0], (NUM_LAYERS, KERNEL_SIZE, F, F),
                           jnp.float32, -bound, bound)
    b = jax.random.uniform(ks[1], (NUM_LAYERS, F), jnp.float32, -bound, bound)
    gamma = jax.random.uniform(ks[2], (NUM_LAYERS, F), jnp.float32, 0.5, 1.5)
    beta = jax.random.uniform(ks[3], (NUM_LAYERS, F), jnp.float32, -0.1, 0.1)
    mean = jax.random.uniform(ks[4], (NUM_LAYERS, F), jnp.float32, -0.5, 0.5)
    var = jax.random.uniform(ks[5], (NUM_LAYERS, F), jnp.float32, 0.5, 1.5)
    params = (w, b, gamma, beta, mean, var)

    x = jax.random.normal(ks[6], (BATCH, SEQ_LEN, F), jnp.float32)

    fn = make_sequence_cnn(params)            # default: batch split -> grid of 2
    out = jax.block_until_ready(fn(x))

    ref = reference(x, params)
    assert out.shape == x.shape and out.dtype == x.dtype
    np.testing.assert_allclose(np.asarray(out), np.asarray(ref),
                               atol=2e-4, rtol=2e-4)
    print("KERNEL_OK")
</pallas_src>

<mosaic_0001>
module attributes {stable_mosaic.version = 11 : i64} {
  func.func @seq_cnn_kernel(%arg0: i32, %arg1: memref<2x64x128xf32, #tpu.memory_space<vmem>>, %arg2: memref<2x896x128xbf16, #tpu.memory_space<vmem>>, %arg3: memref<2x128xf32, #tpu.memory_space<vmem>>, %arg4: memref<2x64x128xf32, #tpu.memory_space<vmem>>) attributes {dimension_semantics = [#tpu.dimension_semantics<parallel>], iteration_bounds = array<i64: 2>, scalar_prefetch = 0 : i64, scratch_operands = 0 : i64, tpu.core_type = #tpu.core_type<tc>, window_params = [{transform_indices = @transform_0, window_bounds = array<i64: 2, 64, 128>}, {pipeline_mode = #tpu.pipeline_mode<synchronous>, transform_indices = @transform_1, window_bounds = array<i64: 2, 896, 128>}, {pipeline_mode = #tpu.pipeline_mode<synchronous>, transform_indices = @transform_2, window_bounds = array<i64: 2, 128>}, {transform_indices = @transform_3, window_bounds = array<i64: 2, 64, 128>}]} {
    %c0 = arith.constant 0 : index
    %c0_0 = arith.constant 0 : index
    %c0_1 = arith.constant 0 : index
    %0 = vector.load %arg1[%c0, %c0_0, %c0_1] : memref<2x64x128xf32, #tpu.memory_space<vmem>>, vector<2x64x128xf32>
    %cst = arith.constant 0.000000e+00 : bf16
    %1 = vector.broadcast %cst : bf16 to vector<2x16x128xbf16>
    %2 = arith.truncf %0 : vector<2x64x128xf32> to vector<2x64x128xbf16>
    %3 = tpu.concatenate %1, %2, %1 in 1 : vector<2x16x128xbf16>, vector<2x64x128xbf16>, vector<2x16x128xbf16> -> vector<2x96x128xbf16>
    %4 = vector.extract_strided_slice %3 {offsets = [0, 10, 0], sizes = [2, 64, 128], strides = [1, 1, 1]} : vector<2x96x128xbf16> to vector<2x64x128xbf16>
    %5 = vector.extract_strided_slice %3 {offsets = [0, 12, 0], sizes = [2, 64, 128], strides = [1, 1, 1]} : vector<2x96x128xbf16> to vector<2x64x128xbf16>
    %6 = vector.extract_strided_slice %3 {offsets = [0, 14, 0], sizes = [2, 64, 128], strides = [1, 1, 1]} : vector<2x96x128xbf16> to vector<2x64x128xbf16>
    %7 = vector.extract_strided_slice %3 {offsets = [0, 16, 0], sizes = [2, 64, 128], strides = [1, 1, 1]} : vector<2x96x128xbf16> to vector<2x64x128xbf16>
    %8 = vector.extract_strided_slice %3 {offsets = [0, 18, 0], sizes = [2, 64, 128], strides = [1, 1, 1]} : vector<2x96x128xbf16> to vector<2x64x128xbf16>
    %9 = vector.extract_strided_slice %3 {offsets = [0, 20, 0], sizes = [2, 64, 128], strides = [1, 1, 1]} : vector<2x96x128xbf16> to vector<2x64x128xbf16>
    %10 = vector.extract_strided_slice %3 {offsets = [0, 22, 0], sizes = [2, 64, 128], strides = [1, 1, 1]} : vector<2x96x128xbf16> to vector<2x64x128xbf16>
    %11 = tpu.concatenate %4, %5, %6, %7, %8, %9, %10 in 2 : vector<2x64x128xbf16>, vector<2x64x128xbf16>, vector<2x64x128xbf16>, vector<2x64x128xbf16>, vector<2x64x128xbf16>, vector<2x64x128xbf16>, vector<2x64x128xbf16> -> vector<2x64x896xbf16>
    %12 = vector.shape_cast %11 : vector<2x64x896xbf16> to vector<128x896xbf16>
    %c0_2 = arith.constant 0 : index
    %c0_3 = arith.constant 0 : index
    %c0_4 = arith.constant 0 : index
    %13 = vector.load %arg2[%c0_2, %c0_3, %c0_4] : memref<2x896x128xbf16, #tpu.memory_space<vmem>>, vector<1x896x128xbf16>
    %14 = vector.shape_cast %13 : vector<1x896x128xbf16> to vector<896x128xbf16>
    %cst_5 = arith.constant dense<0.000000e+00> : vector<128x128xf32>
    %15 = tpu.matmul %12, %14, %cst_5 {dimension_numbers = #tpu.dot_dimension_numbers<[1], [0], [0], [1], [0, 0, 1, 1], [], []>} : vector<128x896xbf16>, vector<896x128xbf16>, vector<128x128xf32> -> vector<128x128xf32>
    %c0_6 = arith.constant 0 : index
    %c0_7 = arith.constant 0 : index
    %16 = vector.load %arg3[%c0_6, %c0_7] : memref<2x128xf32, #tpu.memory_space<vmem>>, vector<1x128xf32>
    %17 = vector.broadcast %16 : vector<1x128xf32> to vector<128x128xf32>
    %18 = arith.addf %15, %17 : vector<128x128xf32>
    %19 = arith.mulf %18, %18 : vector<128x128xf32>
    %20 = arith.mulf %18, %19 : vector<128x128xf32>
    %cst_8 = arith.constant 4.471500e-02 : f32
    %21 = vector.broadcast %cst_8 : f32 to vector<128x128xf32>
    %22 = arith.mulf %21, %20 : vector<128x128xf32>
    %23 = arith.addf %18, %22 : vector<128x128xf32>
    %cst_9 = arith.constant 0.797884583 : f32
    %24 = vector.broadcast %cst_9 : f32 to vector<128x128xf32>
    %25 = arith.mulf %24, %23 : vector<128x128xf32>
    %26 = math.tanh %25 : vector<128x128xf32>
    %cst_10 = arith.constant 1.000000e+00 : f32
    %27 = vector.broadcast %cst_10 : f32 to vector<128x128xf32>
    %28 = arith.addf %27, %26 : vector<128x128xf32>
    %cst_11 = arith.constant 5.000000e-01 : f32
    %29 = vector.broadcast %cst_11 : f32 to vector<128x128xf32>
    %30 = arith.mulf %29, %28 : vector<128x128xf32>
    %31 = arith.mulf %18, %30 : vector<128x128xf32>
    %32 = vector.shape_cast %31 : vector<128x128xf32> to vector<2x64x128xf32>
    %33 = arith.addf %0, %32 : vector<2x64x128xf32>
    %34 = arith.truncf %33 : vector<2x64x128xf32> to vector<2x64x128xbf16>
    %35 = tpu.concatenate %1, %34, %1 in 1 : vector<2x16x128xbf16>, vector<2x64x128xbf16>, vector<2x16x128xbf16> -> vector<2x96x128xbf16>
    %36 = vector.extract_strided_slice %35 {offsets = [0, 10, 0], sizes = [2, 64, 128], strides = [1, 1, 1]} : vector<2x96x128xbf16> to vector<2x64x128xbf16>
    %37 = vector.extract_strided_slice %35 {offsets = [0, 12, 0], sizes = [2, 64, 128], strides = [1, 1, 1]} : vector<2x96x128xbf16> to vector<2x64x128xbf16>
    %38 = vector.extract_strided_slice %35 {offsets = [0, 14, 0], sizes = [2, 64, 128], strides = [1, 1, 1]} : vector<2x96x128xbf16> to vector<2x64x128xbf16>
    %39 = vector.extract_strided_slice %35 {offsets = [0, 16, 0], sizes = [2, 64, 128], strides = [1, 1, 1]} : vector<2x96x128xbf16> to vector<2x64x128xbf16>
    %40 = vector.extract_strided_slice %35 {offsets = [0, 18, 0], sizes = [2, 64, 128], strides = [1, 1, 1]} : vector<2x96x128xbf16> to vector<2x64x128xbf16>
    %41 = vector.extract_strided_slice %35 {offsets = [0, 20, 0], sizes = [2, 64, 128], strides = [1, 1, 1]} : vector<2x96x128xbf16> to vector<2x64x128xbf16>
    %42 = vector.extract_strided_slice %35 {offsets = [0, 22, 0], sizes = [2, 64, 128], strides = [1, 1, 1]} : vector<2x96x128xbf16> to vector<2x64x128xbf16>
    %43 = tpu.concatenate %36, %37, %38, %39, %40, %41, %42 in 2 : vector<2x64x128xbf16>, vector<2x64x128xbf16>, vector<2x64x128xbf16>, vector<2x64x128xbf16>, vector<2x64x128xbf16>, vector<2x64x128xbf16>, vector<2x64x128xbf16> -> vector<2x64x896xbf16>
    %44 = vector.shape_cast %43 : vector<2x64x896xbf16> to vector<128x896xbf16>
    %c1 = arith.constant 1 : index
    %c0_12 = arith.constant 0 : index
    %c0_13 = arith.constant 0 : index
    %45 = vector.load %arg2[%c1, %c0_12, %c0_13] : memref<2x896x128xbf16, #tpu.memory_space<vmem>>, vector<1x896x128xbf16>
    %46 = vector.shape_cast %45 : vector<1x896x128xbf16> to vector<896x128xbf16>
    %cst_14 = arith.constant dense<0.000000e+00> : vector<128x128xf32>
    %47 = tpu.matmul %44, %46, %cst_14 {dimension_numbers = #tpu.dot_dimension_numbers<[1], [0], [0], [1], [0, 0, 1, 1], [], []>} : vector<128x896xbf16>, vector<896x128xbf16>, vector<128x128xf32> -> vector<128x128xf32>
    %c1_15 = arith.constant 1 : index
    %c0_16 = arith.constant 0 : index
    %48 = vector.load %arg3[%c1_15, %c0_16] : memref<2x128xf32, #tpu.memory_space<vmem>>, vector<1x128xf32>
    %49 = vector.broadcast %48 : vector<1x128xf32> to vector<128x128xf32>
    %50 = arith.addf %47, %49 : vector<128x128xf32>
    %51 = arith.mulf %50, %50 : vector<128x128xf32>
    %52 = arith.mulf %50, %51 : vector<128x128xf32>
    %cst_17 = arith.constant 4.471500e-02 : f32
    %53 = vector.broadcast %cst_17 : f32 to vector<128x128xf32>
    %54 = arith.mulf %53, %52 : vector<128x128xf32>
    %55 = arith.addf %50, %54 : vector<128x128xf32>
    %cst_18 = arith.constant 0.797884583 : f32
    %56 = vector.broadcast %cst_18 : f32 to vector<128x128xf32>
    %57 = arith.mulf %56, %55 : vector<128x128xf32>
    %58 = math.tanh %57 : vector<128x128xf32>
    %cst_19 = arith.constant 1.000000e+00 : f32
    %59 = vector.broadcast %cst_19 : f32 to vector<128x128xf32>
    %60 = arith.addf %59, %58 : vector<128x128xf32>
    %cst_20 = arith.constant 5.000000e-01 : f32
    %61 = vector.broadcast %cst_20 : f32 to vector<128x128xf32>
    %62 = arith.mulf %61, %60 : vector<128x128xf32>
    %63 = arith.mulf %50, %62 : vector<128x128xf32>
    %64 = vector.shape_cast %63 : vector<128x128xf32> to vector<2x64x128xf32>
    %65 = arith.addf %33, %64 : vector<2x64x128xf32>
    %c0_21 = arith.constant 0 : index
    %c0_22 = arith.constant 0 : index
    %c0_23 = arith.constant 0 : index
    %66 = vector.load %arg4[%c0_21, %c0_22, %c0_23] : memref<2x64x128xf32, #tpu.memory_space<vmem>>, vector<2x64x128xf32>
    tpu.vector_store %arg4[%c0_21, %c0_22, %c0_23], %65 {strides = array<i32>} : memref<2x64x128xf32, #tpu.memory_space<vmem>>, vector<2x64x128xf32>,
    return
  }
  func.func @transform_0(%arg0: i32) -> (i32, i32, i32) {
    %c0_i32 = arith.constant 0 : i32
    %c0_i32_0 = arith.constant 0 : i32
    %c0_i32_1 = arith.constant 0 : i32
    return %arg0, %c0_i32, %c0_i32_0 : i32, i32, i32
  }
  func.func @transform_1(%arg0: i32) -> (i32, i32, i32) {
    %c0_i32 = arith.constant 0 : i32
    %c0_i32_0 = arith.constant 0 : i32
    %c0_i32_1 = arith.constant 0 : i32
    %c0_i32_2 = arith.constant 0 : i32
    return %c0_i32, %c0_i32_0, %c0_i32_1 : i32, i32, i32
  }
  func.func @transform_2(%arg0: i32) -> (i32, i32) {
    %c0_i32 = arith.constant 0 : i32
    %c0_i32_0 = arith.constant 0 : i32
    %c0_i32_1 = arith.constant 0 : i32
    return %c0_i32, %c0_i32_0 : i32, i32
  }
  func.func @transform_3(%arg0: i32) -> (i32, i32, i32) {
    %c0_i32 = arith.constant 0 : i32
    %c0_i32_0 = arith.constant 0 : i32
    %c0_i32_1 = arith.constant 0 : i32
    return %arg0, %c0_i32, %c0_i32_0 : i32, i32, i32
  }
}

</mosaic_0001>

<llo_original>
// kernel: fwd.1
$region0: #{fwd.1}
  #allocation0 [shape = 'u32[]', space=smem, size = 0x4, offset = 0x4, fixed_abs, tag = 'smem constant byte address 0x4 - core index']
  #allocation1 [shape = 'u32[144,128]{1,0:T(1,128)}', space=vmem, size = 0x12000, scoped, tag = 'internal scratch']
  %s0 = inlined_call_operand.hbm [shape: f32[4,64,128], index: 0, kind: input, shape index: {}]
  %s1 = inlined_call_operand.hbm [shape: bf16[2,896,128], index: 1, kind: input, shape index: {}]
  %s2 = inlined_call_operand.vmem [shape: f32[2,128], index: 2, kind: input, shape index: {}]
  %s3 = inlined_call_operand.hbm [shape: f32[4,64,128], index: 3, kind: output, shape index: {}]
  %s4 = sld [smem:[#allocation0]]
  $region53: #{fwd.1} parent=0
    _
  %s6 = ssub.s32 1, %s4
  %s7 = scalar_select 0, %s6, %s4
  $region1: #{fwd.1} parent=0
    #allocation2 [shape = 'u8[131072]{0}', space=vmem, size = 0x20000, scoped, tag = 'input window, operand 0']
    #allocation3 [shape = 's32[2]{0}', space=sflag, size = 0x8, scoped, tag = 'scoped memory for fwd.1']
    #allocation4 [shape = 's32[2]{0}', space=sflag, size = 0x8, scoped, tag = 'scoped memory for fwd.1']
    #allocation5 [shape = 'u8[458752]{0}', space=vmem, size = 0x70000, scoped, tag = 'input window, operand 1, single buffered']
    #allocation6 [shape = 's32[1]{0}', space=sflag, size = 0x4, scoped, tag = 'scoped memory for fwd.1']
    #allocation7 [shape = 'u8[131072]{0}', space=vmem, size = 0x20000, scoped, tag = 'output window, operand 0']
    %8 = vsyncpa [#allocation3], 0
    %s9 = scalar_lea.sflag [#allocation3], 1
    %10 = vsyncpa %s9, 0
    %11 = vsyncpa [#allocation6], 0
    %12 = vsyncpa [#allocation4], 0
    %s13 = scalar_lea.sflag [#allocation4], 1
    %14 = vsyncpa %s13, 0
    loop: start=0, step=1, limit=4
    $region2: #{fwd.1} parent=1 // loop_pre_header
      _
    $region3: #{fwd.1} parent=1 // loop_header
      %s16 = sphi 0, %s20
      %p17 = scmp.ge.s32.totalorder %s16, 4
      %s26 = sphi 0, %s28
      %s29 = sphi 0, %s26
      %s30 = sphi 0, %s29
      %s46 = sphi 0, %s30
      %s50 = sphi 0, %s50
      %s52 = sphi 0, %s50
      %s53 = sphi 0, %s52
      %s67 = sphi 0, %s53
      %s71 = sphi 0, %s71
      %s73 = sphi 0, %s71
      %s74 = sphi 0, %s73
      %s88 = sphi 0, %s74
      %s94 = sphi 0, %s96
      %s97 = sphi 0, %s94
      %s98 = sphi 0, %s97
      %s114 = sphi 0, %s98
    $region4: #{fwd.1} parent=1 // loop_header_branch
      %19 = sbr.rel (%p17) target = $region8
    $region5: #{fwd.1} parent=1 // loop_body
      %s21 = ssub.s32 %s16, 1
      %s22 = ssub.s32 %s16, 2
      %s23 = sadd.s32 %s16, 1
      %s24 = ssub.s32 %s16, %s23
      %p25 = scmp.eq.s32.totalorder %s24, 0
      %s27 = sadd.s32 %s26, 1
      %s28 = scalar_select %p25, %s26, %s27
      %p31 = pneg %p25
      %p32 = scmp.eq.s32.totalorder %s16, 1
      %p33 = por %p31, %p32
      %p34 = scmp.ne.s32.totalorder %s26, %s29
      %p35 = scmp.eq.s32.totalorder %s16, 0
      %p36 = por %p34, %p35
      %p37 = scmp.ne.s32.totalorder %s26, %s29
      %p38 = scmp.eq.s32.totalorder %s21, 1
      %p39 = por %p37, %p38
      %p40 = scmp.ne.s32.totalorder %s29, %s30
      %p41 = scmp.eq.s32.totalorder %s21, 0
      %p42 = por %p40, %p41
      %p43 = scmp.ne.s32.totalorder %s29, %s30
      %p44 = scmp.eq.s32.totalorder %s22, 1
      %p45 = por %p43, %p44
      %p47 = scmp.ne.s32.totalorder %s30, %s46
      %p48 = scmp.eq.s32.totalorder %s22, 0
      %p49 = por %p47, %p48
      %s51 = sadd.s32 %s50, 1
      %p54 = scmp.eq.s32.totalorder %s16, 1
      %p55 = scmp.ne.s32.totalorder %s50, %s52
      %p56 = scmp.eq.s32.totalorder %s16, 0
      %p57 = por %p55, %p56
      %p58 = scmp.ne.s32.totalorder %s50, %s52
      %p59 = scmp.eq.s32.totalorder %s21, 1
      %p60 = por %p58, %p59
      %p61 = scmp.ne.s32.totalorder %s52, %s53
      %p62 = scmp.eq.s32.totalorder %s21, 0
      %p63 = por %p61, %p62
      %p64 = scmp.ne.s32.totalorder %s52, %s53
      %p65 = scmp.eq.s32.totalorder %s22, 1
      %p66 = por %p64, %p65
      %p68 = scmp.ne.s32.totalorder %s53, %s67
      %p69 = scmp.eq.s32.totalorder %s22, 0
      %p70 = por %p68, %p69
      %s72 = sadd.s32 %s71, 1
      %p75 = scmp.eq.s32.totalorder %s16, 1
      %p76 = scmp.ne.s32.totalorder %s71, %s73
      %p77 = scmp.eq.s32.totalorder %s16, 0
      %p78 = por %p76, %p77
      %p79 = scmp.ne.s32.totalorder %s71, %s73
      %p80 = scmp.eq.s32.totalorder %s21, 1
      %p81 = por %p79, %p80
      %p82 = scmp.ne.s32.totalorder %s73, %s74
      %p83 = scmp.eq.s32.totalorder %s21, 0
      %p84 = por %p82, %p83
      %p85 = scmp.ne.s32.totalorder %s73, %s74
      %p86 = scmp.eq.s32.totalorder %s22, 1
      %p87 = por %p85, %p86
      %p89 = scmp.ne.s32.totalorder %s74, %s88
      %p90 = scmp.eq.s32.totalorder %s22, 0
      %p91 = por %p89, %p90
      %s92 = ssub.s32 %s16, %s23
      %p93 = scmp.eq.s32.totalorder %s92, 0
      %s95 = sadd.s32 %s94, 1
      %s96 = scalar_select %p93, %s94, %s95
      %p99 = pneg %p93
      %p100 = scmp.eq.s32.totalorder %s16, 1
      %p101 = por %p99, %p100
      %p102 = scmp.ne.s32.totalorder %s94, %s97
      %p103 = scmp.eq.s32.totalorder %s16, 0
      %p104 = por %p102, %p103
      %p105 = scmp.ne.s32.totalorder %s94, %s97
      %p106 = scmp.eq.s32.totalorder %s21, 1
      %p107 = por %p105, %p106
      %p108 = scmp.ne.s32.totalorder %s97, %s98
      %p109 = scmp.eq.s32.totalorder %s21, 0
      %p110 = por %p108, %p109
      %p111 = scmp.ne.s32.totalorder %s97, %s98
      %p112 = scmp.eq.s32.totalorder %s22, 1
      %p113 = por %p111, %p112
      %p115 = scmp.ne.s32.totalorder %s98, %s114
      %p116 = scmp.eq.s32.totalorder %s22, 0
      %p117 = por %p115, %p116
      %p118 = scmp.le.s32.totalorder 1, %s16
      %p119 = scmp.lt.s32.totalorder %s16, 3
      %p120 = pnand %p118, %p119
      %p121 = pneg %p120
      // Predicated region
      $region9: #{fwd.1} parent=5 // pred_check
        _
      $region10: #{fwd.1} parent=5 // pred_check_branch
        %123 = sbr.rel (%p120) target = $region12
      $region11: #{fwd.1} parent=5 // pred_region
        %s124 = ssub.s32 %s16, 1
        // Predicated region
        $region13: #{fwd.1} parent=11 // pred_check
          %p125 = pneg %p63
        $region14: #{fwd.1} parent=11 // pred_check_branch
          %127 = sbr.rel (%p125) target = $region16
        $region15: #{fwd.1} parent=11 // pred_region
          %s129 = ssub.s32 14336, 14336
          %130 = vsyncadd [#allocation6], %s129
          %s131 = sshll.u32 [#allocation5], 4
          %s132 = int_to_ptr.vmem [resolvable:$true] %s131
          %137 = dma.hbm_to_vmem [thread:$0]  %s1, 14336, %s132, [#allocation6], 64, 64, 4
        $region16: #{fwd.1} parent=11 // pred_fallthru
          _
        // Predicated region
        $region17: #{fwd.1} parent=11 // pred_check
          %p138 = pneg %p84
        $region18: #{fwd.1} parent=11 // pred_check_branch
          %140 = sbr.rel (%p138) target = $region20
        $region19: #{fwd.1} parent=11 // pred_region
          _
        $region20: #{fwd.1} parent=11 // pred_fallthru
          _
      $region12: #{fwd.1} parent=5 // pred_fallthru
        _
      %p141 = scmp.lt.s32.totalorder %s16, 2
      // Predicated region
      $region21: #{fwd.1} parent=5 // pred_check
        %p142 = pneg %p141
      $region22: #{fwd.1} parent=5 // pred_check_branch
        %144 = sbr.rel (%p142) target = $region24
      $region23: #{fwd.1} parent=5 // pred_region
        // Predicated region
        $region25: #{fwd.1} parent=23 // pred_check
          %p145 = pneg %p36
        $region26: #{fwd.1} parent=23 // pred_check_branch
          %147 = sbr.rel (%p145) target = $region28
        $region27: #{fwd.1} parent=23 // pred_region
          %s148 = sand.u32 %s26, 1
          %s149 = scalar_lea.sflag [#allocation3], %s148
          %s150 = sand.u32 %s26, 1
          %s151 = smul.addr %s150, 128
          %s152 = scalar_lea.vmem [#allocation2], %s151
          %s153 = smul.u32 2, %s16
          %s155 = ssub.s32 2048, 2048
          %156 = vsyncadd %s149, %s155
          %s157 = smul.addr %s153, 8
          %s158 = smul.addr %s157, 128
          %s159 = scalar_lea.hbm %s0, %s158
          %s160 = sshll.u32 %s152, 4
          %s161 = int_to_ptr.vmem [resolvable:$true] %s160
          %166 = dma.hbm_to_vmem [thread:$0]  %s159, 2048, %s161, %s149, 128, 128, 8
        $region28: #{fwd.1} parent=23 // pred_fallthru
          _
      $region24: #{fwd.1} parent=5 // pred_fallthru
        _
      %p167 = scmp.le.s32.totalorder 1, %s16
      %p168 = scmp.lt.s32.totalorder %s16, 3
      %p169 = pnand %p167, %p168
      %p170 = pneg %p169
      // Predicated region
      $region29: #{fwd.1} parent=5 // pred_check
        _
      $region30: #{fwd.1} parent=5 // pred_check_branch
        %172 = sbr.rel (%p169) target = $region32
      $region31: #{fwd.1} parent=5 // pred_region
        %s173 = ssub.s32 %s16, 1
        %s174 = sand.u32 %s29, 1
        %s175 = scalar_lea.sflag [#allocation3], %s174
        %s176 = sand.u32 %s29, 1
        %s177 = smul.addr %s176, 128
        %s178 = scalar_lea.vmem [#allocation2], %s177
        // Predicated region
        $region33: #{fwd.1} parent=31 // pred_check
          %p179 = pneg %p42
        $region34: #{fwd.1} parent=31 // pred_check_branch
          %181 = sbr.rel (%p179) target = $region36
        $region35: #{fwd.1} parent=31 // pred_region
          %182 = dma.done %s175, 2048
        $region36: #{fwd.1} parent=31 // pred_fallthru
          _
        // Predicated region
        $region37: #{fwd.1} parent=31 // pred_check
          %p183 = pneg %p63
        $region38: #{fwd.1} parent=31 // pred_check_branch
          %185 = sbr.rel (%p183) target = $region40
        $region39: #{fwd.1} parent=31 // pred_region
          %186 = dma.done [#allocation6], 14336
        $region40: #{fwd.1} parent=31 // pred_fallthru
          _
        %s187 = sand.u32 %s29, 1
        %s188 = scalar_lea.sflag [#allocation3], %s187
        %s189 = sand.u32 %s29, 1
        %s190 = smul.addr %s189, 128
        %s191 = scalar_lea.vmem [#allocation2], %s190
        %p192 = pneg %p42
        %p193 = pneg %p39
        %p194 = pneg %p63
        %p195 = pneg %p60
        %p196 = pneg %p84
        %p197 = pneg %p81
        %p198 = pneg %p110
        %p199 = pneg %p107
        %s200 = sand.u32 %s97, 1
        %s201 = scalar_lea.sflag [#allocation4], %s200
        %s202 = sand.u32 %s97, 1
        %s203 = smul.addr %s202, 128
        %s204 = scalar_lea.vmem [#allocation7], %s203
        %s205 = smul.u32 2, %s21
        %s206 = smul.u32 2, %s21
        %v208 = vld [vmem:[%s178] sm:$0xff]
        %v209 = vld [vmem:[%s178 + $0x8] sm:$0xff]
        %v210 = vld [vmem:[%s178 + $0x10] sm:$0xff]
        %v211 = vld [vmem:[%s178 + $0x18] sm:$0xff]
        %v212 = vld [vmem:[%s178 + $0x20] sm:$0xff]
        %v213 = vld [vmem:[%s178 + $0x28] sm:$0xff]
        %v214 = vld [vmem:[%s178 + $0x30] sm:$0xff]
        %v215 = vld [vmem:[%s178 + $0x38] sm:$0xff]
        %v216 = vld [vmem:[%s178 + $0x40] sm:$0xff]
        %v217 = vld [vmem:[%s178 + $0x48] sm:$0xff]
        %v218 = vld [vmem:[%s178 + $0x50] sm:$0xff]
        %v219 = vld [vmem:[%s178 + $0x58] sm:$0xff]
        %v220 = vld [vmem:[%s178 + $0x60] sm:$0xff]
        %v221 = vld [vmem:[%s178 + $0x68] sm:$0xff]
        %v222 = vld [vmem:[%s178 + $0x70] sm:$0xff]
        %v223 = vld [vmem:[%s178 + $0x78] sm:$0xff]
        %v224 = vpack.c.bf16 %v209, %v208
        %v225 = vpack.c.bf16 %v211, %v210
        %v226 = vpack.c.bf16 %v213, %v212
        %v227 = vpack.c.bf16 %v215, %v214
        %v228 = vpack.c.bf16 %v217, %v216
        %v229 = vpack.c.bf16 %v219, %v218
        %v230 = vpack.c.bf16 %v221, %v220
        %v231 = vpack.c.bf16 %v223, %v222
        %vm241 = vcmask 1046528
        %v242 = vrot.slane 0, 1
        %v243 = vrot.slane %v224, 1
        %v244 = vsel %vm241, %v242, %v243
        %v245 = vrot.slane %v225, 1
        %v246 = vsel %vm241, %v243, %v245
        %v247 = vrot.slane %v226, 1
        %v248 = vsel %vm241, %v245, %v247
        %v249 = vrot.slane %v227, 1
        %v250 = vsel %vm241, %v247, %v249
        %v251 = vrot.slane %v228, 1
        %v252 = vsel %vm241, %v242, %v251
        %v253 = vrot.slane %v229, 1
        %v254 = vsel %vm241, %v251, %v253
        %v255 = vrot.slane %v230, 1
        %v256 = vsel %vm241, %v253, %v255
        %v257 = vrot.slane %v231, 1
        %v258 = vsel %vm241, %v255, %v257
        %vm259 = vcmask 1045504
        %v260 = vrot.slane 0, 2
        %v261 = vrot.slane %v224, 2
        %v262 = vsel %vm259, %v260, %v261
        %v263 = vrot.slane %v225, 2
        %v264 = vsel %vm259, %v261, %v263
        %v265 = vrot.slane %v226, 2
        %v266 = vsel %vm259, %v263, %v265
        %v267 = vrot.slane %v227, 2
        %v268 = vsel %vm259, %v265, %v267
        %v269 = vrot.slane %v228, 2
        %v270 = vsel %vm259, %v260, %v269
        %v271 = vrot.slane %v229, 2
        %v272 = vsel %vm259, %v269, %v271
        %v273 = vrot.slane %v230, 2
        %v274 = vsel %vm259, %v271, %v273
        %v275 = vrot.slane %v231, 2
        %v276 = vsel %vm259, %v273, %v275
        %vm277 = vcmask 1044480
        %v278 = vrot.slane %v224, 3
        %v279 = vrot.slane %v225, 3
        %v280 = vsel %vm277, %v278, %v279
        %v281 = vrot.slane %v226, 3
        %v282 = vsel %vm277, %v279, %v281
        %v283 = vrot.slane %v227, 3
        %v284 = vsel %vm277, %v281, %v283
        %v285 = vrot.slane %v228, 3
        %v286 = vrot.slane %v229, 3
        %v287 = vsel %vm277, %v285, %v286
        %v288 = vrot.slane %v230, 3
        %v289 = vsel %vm277, %v286, %v288
        %v290 = vrot.slane %v231, 3
        %v291 = vsel %vm277, %v288, %v290
        %vm292 = vcmask 1043456
        %v293 = vrot.slane %v224, 4
        %v294 = vrot.slane %v225, 4
        %v295 = vsel %vm292, %v293, %v294
        %v296 = vrot.slane %v226, 4
        %v297 = vsel %vm292, %v294, %v296
        %v298 = vrot.slane %v227, 4
        %v299 = vsel %vm292, %v296, %v298
        %v300 = vrot.slane 0, 4
        %v301 = vsel %vm292, %v298, %v300
        %v302 = vrot.slane %v228, 4
        %v303 = vrot.slane %v229, 4
        %v304 = vsel %vm292, %v302, %v303
        %v305 = vrot.slane %v230, 4
        %v306 = vsel %vm292, %v303, %v305
        %v307 = vrot.slane %v231, 4
        %v308 = vsel %vm292, %v305, %v307
        %v309 = vsel %vm292, %v307, %v300
        %vm310 = vcmask 1042432
        %v311 = vrot.slane %v224, 5
        %v312 = vrot.slane %v225, 5
        %v313 = vsel %vm310, %v311, %v312
        %v314 = vrot.slane %v226, 5
        %v315 = vsel %vm310, %v312, %v314
        %v316 = vrot.slane %v227, 5
        %v317 = vsel %vm310, %v314, %v316
        %v318 = vrot.slane 0, 5
        %v319 = vsel %vm310, %v316, %v318
        %v320 = vrot.slane %v228, 5
        %v321 = vrot.slane %v229, 5
        %v322 = vsel %vm310, %v320, %v321
        %v323 = vrot.slane %v230, 5
        %v324 = vsel %vm310, %v321, %v323
        %v325 = vrot.slane %v231, 5
        %v326 = vsel %vm310, %v323, %v325
        %v327 = vsel %vm310, %v325, %v318
        %vm328 = vcmask 1041408
        %v329 = vrot.slane %v224, 6
        %v330 = vrot.slane %v225, 6
        %v331 = vsel %vm328, %v329, %v330
        %v332 = vrot.slane %v226, 6
        %v333 = vsel %vm328, %v330, %v332
        %v334 = vrot.slane %v227, 6
        %v335 = vsel %vm328, %v332, %v334
        %v336 = vrot.slane 0, 6
        %v337 = vsel %vm328, %v334, %v336
        %v338 = vrot.slane %v228, 6
        %v339 = vrot.slane %v229, 6
        %v340 = vsel %vm328, %v338, %v339
        %v341 = vrot.slane %v230, 6
        %v342 = vsel %vm328, %v339, %v341
        %v343 = vrot.slane %v231, 6
        %v344 = vsel %vm328, %v341, %v343
        %v345 = vsel %vm328, %v343, %v336
        %v346 = vsel %vm310, %v318, %v311
        %v347 = vrot.slane %v244, 5
        %v348 = vrot.slane %v246, 5
        %v349 = vsel %vm310, %v347, %v348
        %v350 = vrot.slane %v262, 5
        %v351 = vrot.slane %v264, 5
        %v352 = vsel %vm310, %v350, %v351
        %v353 = vrot.slane %v278, 5
        %v354 = vrot.slane %v280, 5
        %v355 = vsel %vm310, %v353, %v354
        %v356 = vrot.slane %v293, 5
        %v357 = vrot.slane %v295, 5
        %v358 = vsel %vm310, %v356, %v357
        %v359 = vrot.slane %v311, 5
        %v360 = vrot.slane %v313, 5
        %v361 = vsel %vm310, %v359, %v360
        %v362 = vrot.slane %v329, 5
        %v363 = vrot.slane %v331, 5
        %v364 = vsel %vm310, %v362, %v363
        %v365 = vrot.slane %v248, 5
        %v366 = vsel %vm310, %v348, %v365
        %v367 = vrot.slane %v266, 5
        %v368 = vsel %vm310, %v351, %v367
        %v369 = vrot.slane %v282, 5
        %v370 = vsel %vm310, %v354, %v369
        %v371 = vrot.slane %v297, 5
        %v372 = vsel %vm310, %v357, %v371
        %v373 = vrot.slane %v315, 5
        %v374 = vsel %vm310, %v360, %v373
        %v375 = vrot.slane %v333, 5
        %v376 = vsel %vm310, %v363, %v375
        %v377 = vrot.slane %v250, 5
        %v378 = vsel %vm310, %v365, %v377
        %v379 = vrot.slane %v268, 5
        %v380 = vsel %vm310, %v367, %v379
        %v381 = vrot.slane %v284, 5
        %v382 = vsel %vm310, %v369, %v381
        %v383 = vrot.slane %v299, 5
        %v384 = vsel %vm310, %v371, %v383
        %v385 = vrot.slane %v317, 5
        %v386 = vsel %vm310, %v373, %v385
        %v387 = vrot.slane %v335, 5
        %v388 = vsel %vm310, %v375, %v387
        %v389 = vrot.slane %v249, 5
        %v390 = vsel %vm310, %v377, %v389
        %v391 = vrot.slane %v267, 5
        %v392 = vsel %vm310, %v379, %v391
        %v393 = vrot.slane %v283, 5
        %v394 = vsel %vm310, %v381, %v393
        %v395 = vrot.slane %v301, 5
        %v396 = vsel %vm310, %v383, %v395
        %v397 = vrot.slane %v319, 5
        %v398 = vsel %vm310, %v385, %v397
        %v399 = vrot.slane %v337, 5
        %v400 = vsel %vm310, %v387, %v399
        %v401 = vsel %vm310, %v318, %v320
        %v402 = vrot.slane %v252, 5
        %v403 = vrot.slane %v254, 5
        %v404 = vsel %vm310, %v402, %v403
        %v405 = vrot.slane %v270, 5
        %v406 = vrot.slane %v272, 5
        %v407 = vsel %vm310, %v405, %v406
        %v408 = vrot.slane %v285, 5
        %v409 = vrot.slane %v287, 5
        %v410 = vsel %vm310, %v408, %v409
        %v411 = vrot.slane %v302, 5
        %v412 = vrot.slane %v304, 5
        %v413 = vsel %vm310, %v411, %v412
        %v414 = vrot.slane %v320, 5
        %v415 = vrot.slane %v322, 5
        %v416 = vsel %vm310, %v414, %v415
        %v417 = vrot.slane %v338, 5
        %v418 = vrot.slane %v340, 5
        %v419 = vsel %vm310, %v417, %v418
        %v420 = vrot.slane %v256, 5
        %v421 = vsel %vm310, %v403, %v420
        %v422 = vrot.slane %v274, 5
        %v423 = vsel %vm310, %v406, %v422
        %v424 = vrot.slane %v289, 5
        %v425 = vsel %vm310, %v409, %v424
        %v426 = vrot.slane %v306, 5
        %v427 = vsel %vm310, %v412, %v426
        %v428 = vrot.slane %v324, 5
        %v429 = vsel %vm310, %v415, %v428
        %v430 = vrot.slane %v342, 5
        %v431 = vsel %vm310, %v418, %v430
        %v432 = vrot.slane %v258, 5
        %v433 = vsel %vm310, %v420, %v432
        %v434 = vrot.slane %v276, 5
        %v435 = vsel %vm310, %v422, %v434
        %v436 = vrot.slane %v291, 5
        %v437 = vsel %vm310, %v424, %v436
        %v438 = vrot.slane %v308, 5
        %v439 = vsel %vm310, %v426, %v438
        %v440 = vrot.slane %v326, 5
        %v441 = vsel %vm310, %v428, %v440
        %v442 = vrot.slane %v344, 5
        %v443 = vsel %vm310, %v430, %v442
        %v444 = vrot.slane %v257, 5
        %v445 = vsel %vm310, %v432, %v444
        %v446 = vrot.slane %v275, 5
        %v447 = vsel %vm310, %v434, %v446
        %v448 = vrot.slane %v290, 5
        %v449 = vsel %vm310, %v436, %v448
        %v450 = vrot.slane %v309, 5
        %v451 = vsel %vm310, %v438, %v450
        %v452 = vrot.slane %v327, 5
        %v453 = vsel %vm310, %v440, %v452
        %v454 = vrot.slane %v345, 5
        %v455 = vsel %vm310, %v442, %v454
        %v512 = vld [vmem:[#allocation5] sm:$0xf]
        %v513 = vld [vmem:[#allocation5 + $0x4] sm:$0xf]
        %v514 = vld [vmem:[#allocation5 + $0x8] sm:$0xf]
        %v515 = vld [vmem:[#allocation5 + $0xc] sm:$0xf]
        %v516 = vld [vmem:[#allocation5 + $0x10] sm:$0xf]
        %v517 = vld [vmem:[#allocation5 + $0x14] sm:$0xf]
        %v518 = vld [vmem:[#allocation5 + $0x18] sm:$0xf]
        %v519 = vld [vmem:[#allocation5 + $0x1c] sm:$0xf]
        %v520 = vld [vmem:[#allocation5 + $0x20] sm:$0xf]
        %v521 = vld [vmem:[#allocation5 + $0x24] sm:$0xf]
        %v522 = vld [vmem:[#allocation5 + $0x28] sm:$0xf]
        %v523 = vld [vmem:[#allocation5 + $0x2c] sm:$0xf]
        %v524 = vld [vmem:[#allocation5 + $0x30] sm:$0xf]
        %v525 = vld [vmem:[#allocation5 + $0x34] sm:$0xf]
        %v526 = vld [vmem:[#allocation5 + $0x38] sm:$0xf]
        %v527 = vld [vmem:[#allocation5 + $0x3c] sm:$0xf]
        %v528 = vld [vmem:[#allocation5 + $0x40] sm:$0xf]
        %v529 = vld [vmem:[#allocation5 + $0x44] sm:$0xf]
        %v530 = vld [vmem:[#allocation5 + $0x48] sm:$0xf]
        %v531 = vld [vmem:[#allocation5 + $0x4c] sm:$0xf]
        %v532 = vld [vmem:[#allocation5 + $0x50] sm:$0xf]
        %v533 = vld [vmem:[#allocation5 + $0x54] sm:$0xf]
        %v534 = vld [vmem:[#allocation5 + $0x58] sm:$0xf]
        %v535 = vld [vmem:[#allocation5 + $0x5c] sm:$0xf]
        %v536 = vld [vmem:[#allocation5 + $0x60] sm:$0xf]
        %v537 = vld [vmem:[#allocation5 + $0x64] sm:$0xf]
        %v538 = vld [vmem:[#allocation5 + $0x68] sm:$0xf]
        %v539 = vld [vmem:[#allocation5 + $0x6c] sm:$0xf]
        %v540 = vld [vmem:[#allocation5 + $0x70] sm:$0xf]
        %v541 = vld [vmem:[#allocation5 + $0x74] sm:$0xf]
        %v542 = vld [vmem:[#allocation5 + $0x78] sm:$0xf]
        %v543 = vld [vmem:[#allocation5 + $0x7c] sm:$0xf]
        %v544 = vld [vmem:[#allocation5 + $0x80] sm:$0xf]
        %v545 = vld [vmem:[#allocation5 + $0x84] sm:$0xf]
        %v546 = vld [vmem:[#allocation5 + $0x88] sm:$0xf]
        %v547 = vld [vmem:[#allocation5 + $0x8c] sm:$0xf]
        %v548 = vld [vmem:[#allocation5 + $0x90] sm:$0xf]
        %v549 = vld [vmem:[#allocation5 + $0x94] sm:$0xf]
        %v550 = vld [vmem:[#allocation5 + $0x98] sm:$0xf]
        %v551 = vld [vmem:[#allocation5 + $0x9c] sm:$0xf]
        %v552 = vld [vmem:[#allocation5 + $0xa0] sm:$0xf]
        %v553 = vld [vmem:[#allocation5 + $0xa4] sm:$0xf]
        %v554 = vld [vmem:[#allocation5 + $0xa8] sm:$0xf]
        %v555 = vld [vmem:[#allocation5 + $0xac] sm:$0xf]
        %v556 = vld [vmem:[#allocation5 + $0xb0] sm:$0xf]
        %v557 = vld [vmem:[#allocation5 + $0xb4] sm:$0xf]
        %v558 = vld [vmem:[#allocation5 + $0xb8] sm:$0xf]
        %v559 = vld [vmem:[#allocation5 + $0xbc] sm:$0xf]
        %v560 = vld [vmem:[#allocation5 + $0xc0] sm:$0xf]
        %v561 = vld [vmem:[#allocation5 + $0xc4] sm:$0xf]
        %v562 = vld [vmem:[#allocation5 + $0xc8] sm:$0xf]
        %v563 = vld [vmem:[#allocation5 + $0xcc] sm:$0xf]
        %v564 = vld [vmem:[#allocation5 + $0xd0] sm:$0xf]
        %v565 = vld [vmem:[#allocation5 + $0xd4] sm:$0xf]
        %v566 = vld [vmem:[#allocation5 + $0xd8] sm:$0xf]
        %v567 = vld [vmem:[#allocation5 + $0xdc] sm:$0xf]
        %v568 = vld [vmem:[#allocation5 + $0xe0] sm:$0xf]
        %v569 = vld [vmem:[#allocation5 + $0xe4] sm:$0xf]
        %v570 = vld [vmem:[#allocation5 + $0xe8] sm:$0xf]
        %v571 = vld [vmem:[#allocation5 + $0xec] sm:$0xf]
        %v572 = vld [vmem:[#allocation5 + $0xf0] sm:$0xf]
        %v573 = vld [vmem:[#allocation5 + $0xf4] sm:$0xf]
        %v574 = vld [vmem:[#allocation5 + $0xf8] sm:$0xf]
        %v575 = vld [vmem:[#allocation5 + $0xfc] sm:$0xf]
        %v576 = vld [vmem:[#allocation5 + $0x100] sm:$0xf]
        %v577 = vld [vmem:[#allocation5 + $0x104] sm:$0xf]
        %v578 = vld [vmem:[#allocation5 + $0x108] sm:$0xf]
        %v579 = vld [vmem:[#allocation5 + $0x10c] sm:$0xf]
        %v580 = vld [vmem:[#allocation5 + $0x110] sm:$0xf]
        %v581 = vld [vmem:[#allocation5 + $0x114] sm:$0xf]
        %v582 = vld [vmem:[#allocation5 + $0x118] sm:$0xf]
        %v583 = vld [vmem:[#allocation5 + $0x11c] sm:$0xf]
        %v584 = vld [vmem:[#allocation5 + $0x120] sm:$0xf]
        %v585 = vld [vmem:[#allocation5 + $0x124] sm:$0xf]
        %v586 = vld [vmem:[#allocation5 + $0x128] sm:$0xf]
        %v587 = vld [vmem:[#allocation5 + $0x12c] sm:$0xf]
        %v588 = vld [vmem:[#allocation5 + $0x130] sm:$0xf]
        %v589 = vld [vmem:[#allocation5 + $0x134] sm:$0xf]
        %v590 = vld [vmem:[#allocation5 + $0x138] sm:$0xf]
        %v591 = vld [vmem:[#allocation5 + $0x13c] sm:$0xf]
        %v592 = vld [vmem:[#allocation5 + $0x140] sm:$0xf]
        %v593 = vld [vmem:[#allocation5 + $0x144] sm:$0xf]
        %v594 = vld [vmem:[#allocation5 + $0x148] sm:$0xf]
        %v595 = vld [vmem:[#allocation5 + $0x14c] sm:$0xf]
        %v596 = vld [vmem:[#allocation5 + $0x150] sm:$0xf]
        %v597 = vld [vmem:[#allocation5 + $0x154] sm:$0xf]
        %v598 = vld [vmem:[#allocation5 + $0x158] sm:$0xf]
        %v599 = vld [vmem:[#allocation5 + $0x15c] sm:$0xf]
        %v600 = vld [vmem:[#allocation5 + $0x160] sm:$0xf]
        %v601 = vld [vmem:[#allocation5 + $0x164] sm:$0xf]
        %v602 = vld [vmem:[#allocation5 + $0x168] sm:$0xf]
        %v603 = vld [vmem:[#allocation5 + $0x16c] sm:$0xf]
        %v604 = vld [vmem:[#allocation5 + $0x170] sm:$0xf]
        %v605 = vld [vmem:[#allocation5 + $0x174] sm:$0xf]
        %v606 = vld [vmem:[#allocation5 + $0x178] sm:$0xf]
        %v607 = vld [vmem:[#allocation5 + $0x17c] sm:$0xf]
        %v608 = vld [vmem:[#allocation5 + $0x180] sm:$0xf]
        %v609 = vld [vmem:[#allocation5 + $0x184] sm:$0xf]
        %v610 = vld [vmem:[#allocation5 + $0x188] sm:$0xf]
        %v611 = vld [vmem:[#allocation5 + $0x18c] sm:$0xf]
        %v612 = vld [vmem:[#allocation5 + $0x190] sm:$0xf]
        %v613 = vld [vmem:[#allocation5 + $0x194] sm:$0xf]
        %v614 = vld [vmem:[#allocation5 + $0x198] sm:$0xf]
        %v615 = vld [vmem:[#allocation5 + $0x19c] sm:$0xf]
        %v616 = vld [vmem:[#allocation5 + $0x1a0] sm:$0xf]
        %v617 = vld [vmem:[#allocation5 + $0x1a4] sm:$0xf]
        %v618 = vld [vmem:[#allocation5 + $0x1a8] sm:$0xf]
        %v619 = vld [vmem:[#allocation5 + $0x1ac] sm:$0xf]
        %v620 = vld [vmem:[#allocation5 + $0x1b0] sm:$0xf]
        %v621 = vld [vmem:[#allocation5 + $0x1b4] sm:$0xf]
        %v622 = vld [vmem:[#allocation5 + $0x1b8] sm:$0xf]
        %v623 = vld [vmem:[#allocation5 + $0x1bc] sm:$0xf]
        %v624 = vld [vmem:[%s2] sm:$0x1]
        %v625 = vlaneseq
        %v626 = vshrl.u32 %v625, 7
        %v627 = vsub.s32 0, %v626
        %v628 = vrot.slane %v624, %v627
        %v741 = vunpack.c.l.b16 %v512
        %v742 = vunpack.c.l.b16 %v513
        %v743 = vunpack.c.l.b16 %v514
        %v744 = vunpack.c.l.b16 %v515
        %v745 = vunpack.c.l.b16 %v516
        %v746 = vunpack.c.l.b16 %v517
        %v747 = vunpack.c.l.b16 %v518
        %v748 = vunpack.c.l.b16 %v519
        %v749 = vunpack.c.l.b16 %v520
        %v750 = vunpack.c.l.b16 %v521
        %v751 = vunpack.c.l.b16 %v522
        %v752 = vunpack.c.l.b16 %v523
        %v753 = vunpack.c.l.b16 %v524
        %v754 = vunpack.c.l.b16 %v525
        %v755 = vunpack.c.l.b16 %v526
        %v756 = vunpack.c.l.b16 %v527
        %v757 = vunpack.c.l.b16 %v528
        %v758 = vunpack.c.l.b16 %v529
        %v759 = vunpack.c.l.b16 %v530
        %v760 = vunpack.c.l.b16 %v531
        %v761 = vunpack.c.l.b16 %v532
        %v762 = vunpack.c.l.b16 %v533
        %v763 = vunpack.c.l.b16 %v534
        %v764 = vunpack.c.l.b16 %v535
        %v765 = vunpack.c.l.b16 %v536
        %v766 = vunpack.c.l.b16 %v537
        %v767 = vunpack.c.l.b16 %v538
        %v768 = vunpack.c.l.b16 %v539
        %v769 = vunpack.c.l.b16 %v540
        %v770 = vunpack.c.l.b16 %v541
        %v771 = vunpack.c.l.b16 %v542
        %v772 = vunpack.c.l.b16 %v543
        %v773 = vunpack.c.l.b16 %v544
        %v774 = vunpack.c.l.b16 %v545
        %v775 = vunpack.c.l.b16 %v546
        %v776 = vunpack.c.l.b16 %v547
        %v777 = vunpack.c.l.b16 %v548
        %v778 = vunpack.c.l.b16 %v549
        %v779 = vunpack.c.l.b16 %v550
        %v780 = vunpack.c.l.b16 %v551
        %v781 = vunpack.c.l.b16 %v552
        %v782 = vunpack.c.l.b16 %v553
        %v783 = vunpack.c.l.b16 %v554
        %v784 = vunpack.c.l.b16 %v555
        %v785 = vunpack.c.l.b16 %v556
        %v786 = vunpack.c.l.b16 %v557
        %v787 = vunpack.c.l.b16 %v558
        %v788 = vunpack.c.l.b16 %v559
        %v789 = vunpack.c.l.b16 %v560
        %v790 = vunpack.c.l.b16 %v561
        %v791 = vunpack.c.l.b16 %v562
        %v792 = vunpack.c.l.b16 %v563
        %v793 = vunpack.c.l.b16 %v564
        %v794 = vunpack.c.l.b16 %v565
        %v795 = vunpack.c.l.b16 %v566
        %v796 = vunpack.c.l.b16 %v567
        %v797 = vunpack.c.l.b16 %v568
        %v798 = vunpack.c.l.b16 %v569
        %v799 = vunpack.c.l.b16 %v570
        %v800 = vunpack.c.l.b16 %v571
        %v801 = vunpack.c.l.b16 %v572
        %v802 = vunpack.c.l.b16 %v573
        %v803 = vunpack.c.l.b16 %v574
        %v804 = vunpack.c.l.b16 %v575
        %v805 = vunpack.c.l.b16 %v576
        %v806 = vunpack.c.l.b16 %v577
        %v807 = vunpack.c.l.b16 %v578
        %v808 = vunpack.c.l.b16 %v579
        %v809 = vunpack.c.l.b16 %v580
        %v810 = vunpack.c.l.b16 %v581
        %v811 = vunpack.c.l.b16 %v582
        %v812 = vunpack.c.l.b16 %v583
        %v813 = vunpack.c.l.b16 %v584
        %v814 = vunpack.c.l.b16 %v585
        %v815 = vunpack.c.l.b16 %v586
        %v816 = vunpack.c.l.b16 %v587
        %v817 = vunpack.c.l.b16 %v588
        %v818 = vunpack.c.l.b16 %v589
        %v819 = vunpack.c.l.b16 %v590
        %v820 = vunpack.c.l.b16 %v591
        %v821 = vunpack.c.l.b16 %v592
        %v822 = vunpack.c.l.b16 %v593
        %v823 = vunpack.c.l.b16 %v594
        %v824 = vunpack.c.l.b16 %v595
        %v825 = vunpack.c.l.b16 %v596
        %v826 = vunpack.c.l.b16 %v597
        %v827 = vunpack.c.l.b16 %v598
        %v828 = vunpack.c.l.b16 %v599
        %v829 = vunpack.c.l.b16 %v600
        %v830 = vunpack.c.l.b16 %v601
        %v831 = vunpack.c.l.b16 %v602
        %v832 = vunpack.c.l.b16 %v603
        %v833 = vunpack.c.l.b16 %v604
        %v834 = vunpack.c.l.b16 %v605
        %v835 = vunpack.c.l.b16 %v606
        %v836 = vunpack.c.l.b16 %v607
        %v837 = vunpack.c.l.b16 %v608
        %v838 = vunpack.c.l.b16 %v609
        %v839 = vunpack.c.l.b16 %v610
        %v840 = vunpack.c.l.b16 %v611
        %v841 = vunpack.c.l.b16 %v612
        %v842 = vunpack.c.l.b16 %v613
        %v843 = vunpack.c.l.b16 %v614
        %v844 = vunpack.c.l.b16 %v615
        %v845 = vunpack.c.l.b16 %v616
        %v846 = vunpack.c.l.b16 %v617
        %v847 = vunpack.c.l.b16 %v618
        %v848 = vunpack.c.l.b16 %v619
        %v849 = vunpack.c.l.b16 %v620
        %v850 = vunpack.c.l.b16 %v621
        %v851 = vunpack.c.l.b16 %v622
        %v852 = vunpack.c.l.b16 %v623
        %v853 = vpack.c.b16 %v742, %v741
        %v854 = vpack.c.b16 %v744, %v743
        %v855 = vpack.c.b16 %v746, %v745
        %v856 = vpack.c.b16 %v748, %v747
        %v857 = vpack.c.b16 %v750, %v749
        %v858 = vpack.c.b16 %v752, %v751
        %v859 = vpack.c.b16 %v754, %v753
        %v860 = vpack.c.b16 %v756, %v755
        %v861 = vpack.c.b16 %v758, %v757
        %v862 = vpack.c.b16 %v760, %v759
        %v863 = vpack.c.b16 %v762, %v761
        %v864 = vpack.c.b16 %v764, %v763
        %v865 = vpack.c.b16 %v766, %v765
        %v866 = vpack.c.b16 %v768, %v767
        %v867 = vpack.c.b16 %v770, %v769
        %v868 = vpack.c.b16 %v772, %v771
        %v869 = vpack.c.b16 %v774, %v773
        %v870 = vpack.c.b16 %v776, %v775
        %v871 = vpack.c.b16 %v778, %v777
        %v872 = vpack.c.b16 %v780, %v779
        %v873 = vpack.c.b16 %v782, %v781
        %v874 = vpack.c.b16 %v784, %v783
        %v875 = vpack.c.b16 %v786, %v785
        %v876 = vpack.c.b16 %v788, %v787
        %v877 = vpack.c.b16 %v790, %v789
        %v878 = vpack.c.b16 %v792, %v791
        %v879 = vpack.c.b16 %v794, %v793
        %v880 = vpack.c.b16 %v796, %v795
        %v881 = vpack.c.b16 %v798, %v797
        %v882 = vpack.c.b16 %v800, %v799
        %v883 = vpack.c.b16 %v802, %v801
        %v884 = vpack.c.b16 %v804, %v803
        %v885 = vpack.c.b16 %v806, %v805
        %v886 = vpack.c.b16 %v808, %v807
        %v887 = vpack.c.b16 %v810, %v809
        %v888 = vpack.c.b16 %v812, %v811
        %v889 = vpack.c.b16 %v814, %v813
        %v890 = vpack.c.b16 %v816, %v815
        %v891 = vpack.c.b16 %v818, %v817
        %v892 = vpack.c.b16 %v820, %v819
        %v893 = vpack.c.b16 %v822, %v821
        %v894 = vpack.c.b16 %v824, %v823
        %v895 = vpack.c.b16 %v826, %v825
        %v896 = vpack.c.b16 %v828, %v827
        %v897 = vpack.c.b16 %v830, %v829
        %v898 = vpack.c.b16 %v832, %v831
        %v899 = vpack.c.b16 %v834, %v833
        %v900 = vpack.c.b16 %v836, %v835
        %v901 = vpack.c.b16 %v838, %v837
        %v902 = vpack.c.b16 %v840, %v839
        %v903 = vpack.c.b16 %v842, %v841
        %v904 = vpack.c.b16 %v844, %v843
        %v905 = vpack.c.b16 %v846, %v845
        %v906 = vpack.c.b16 %v848, %v847
        %v907 = vpack.c.b16 %v850, %v849
        %v908 = vpack.c.b16 %v852, %v851
        %965 = vmatprep.subr.bf16.mxu0 0
        %966 = vmatpush1.bf16.msra.mxu0 %v860
        %967 = vmatprep.subr.bf16.mxu0 0
        %968 = vmatpush1.bf16.msra.mxu0 %v859
        %969 = vmatprep.subr.bf16.mxu0 0
        %970 = vmatpush1.bf16.msra.mxu0 %v858
        %971 = vmatprep.subr.bf16.mxu0 0
        %972 = vmatpush1.bf16.msra.mxu0 %v857
        %973 = vmatprep.subr.bf16.mxu0 0
        %974 = vmatpush1.bf16.msra.mxu0 %v856
        %975 = vmatprep.subr.bf16.mxu0 0
        %976 = vmatpush1.bf16.msra.mxu0 %v855
        %977 = vmatprep.subr.bf16.mxu0 0
        %978 = vmatpush1.bf16.msra.mxu0 %v854
        %979 = vmatprep.subr.bf16.mxu0 0
        %980 = vmatpush1.bf16.msra.mxu0 %v853
        %981 = vmatprep.subr.bf16.mxu0 0
        %982 = vmatpush2.bf16.msra.mxu0 %v868
        %983 = vmatprep.subr.bf16.mxu0 0
        %984 = vmatpush2.bf16.msra.mxu0 %v867
        %985 = vmatprep.subr.bf16.mxu0 0
        %986 = vmatpush2.bf16.msra.mxu0 %v866
        %987 = vmatprep.subr.bf16.mxu0 0
        %988 = vmatpush2.bf16.msra.mxu0 %v865
        %989 = vmatprep.subr.bf16.mxu0 0
        %990 = vmatpush2.bf16.msra.mxu0 %v864
        %991 = vmatprep.subr.bf16.mxu0 0
        %992 = vmatpush2.bf16.msra.mxu0 %v863
        %993 = vmatprep.subr.bf16.mxu0 0
        %994 = vmatpush2.bf16.msra.mxu0 %v862
        %995 = vmatprep.subr.bf16.mxu0 0
        %996 = vmatpush2.bf16.msra.mxu0 %v861
        %997 = vmatprep.mubr.bf16.mxu0 %v349
        %998 = vmatmul.mubr.bf16.gmra.mxu0 %v346
        %v999 = vpop.f32.mrf.mxu0
        %v1000 = vadd.f32 %v628, %v999
        %v1001 = vpop.f32.mrf.mxu0
        %v1002 = vpop.f32.mrf.mxu0
        %v1003 = vadd.f32 %v628, %v1002
        %v1004 = vpop.f32.mrf.mxu0
        %1005 = vmatprep.mubr.bf16.mxu0 %v366
        %1006 = vmatmul.mubr.bf16.gmra.mxu0 %v313
        %v1007 = vpop.f32.mrf.mxu0
        %v1008 = vadd.f32 %v628, %v1007
        %v1009 = vpop.f32.mrf.mxu0
        %v1010 = vpop.f32.mrf.mxu0
        %v1011 = vadd.f32 %v628, %v1010
        %v1012 = vpop.f32.mrf.mxu0
        %1013 = vmatprep.mubr.bf16.mxu0 %v378
        %1014 = vmatmul.mubr.bf16.gmra.mxu0 %v315
        %v1015 = vpop.f32.mrf.mxu0
        %v1016 = vadd.f32 %v628, %v1015
        %v1017 = vpop.f32.mrf.mxu0
        %v1018 = vpop.f32.mrf.mxu0
        %v1019 = vadd.f32 %v628, %v1018
        %v1020 = vpop.f32.mrf.mxu0
        %1021 = vmatprep.mubr.bf16.mxu0 %v390
        %1022 = vmatmul.mubr.bf16.gmra.mxu0 %v317
        %v1023 = vpop.f32.mrf.mxu0
        %v1024 = vadd.f32 %v628, %v1023
        %v1025 = vpop.f32.mrf.mxu0
        %v1026 = vpop.f32.mrf.mxu0
        %v1027 = vadd.f32 %v628, %v1026
        %v1028 = vpop.f32.mrf.mxu0
        %1029 = vmatprep.mubr.bf16.mxu0 %v404
        %1030 = vmatmul.mubr.bf16.gmra.mxu0 %v401
        %v1031 = vpop.f32.mrf.mxu0
        %v1032 = vadd.f32 %v628, %v1031
        %v1033 = vpop.f32.mrf.mxu0
        %v1034 = vpop.f32.mrf.mxu0
        %v1035 = vadd.f32 %v628, %v1034
        %v1036 = vpop.f32.mrf.mxu0
        %1037 = vmatprep.mubr.bf16.mxu0 %v421
        %1038 = vmatmul.mubr.bf16.gmra.mxu0 %v322
        %v1039 = vpop.f32.mrf.mxu0
        %v1040 = vadd.f32 %v628, %v1039
        %v1041 = vpop.f32.mrf.mxu0
        %v1042 = vpop.f32.mrf.mxu0
        %v1043 = vadd.f32 %v628, %v1042
        %v1044 = vpop.f32.mrf.mxu0
        %1045 = vmatprep.mubr.bf16.mxu0 %v433
        %1046 = vmatmul.mubr.bf16.gmra.mxu0 %v324
        %v1047 = vpop.f32.mrf.mxu0
        %v1048 = vadd.f32 %v628, %v1047
        %v1049 = vpop.f32.mrf.mxu0
        %v1050 = vpop.f32.mrf.mxu0
        %v1051 = vadd.f32 %v628, %v1050
        %v1052 = vpop.f32.mrf.mxu0
        %1053 = vmatprep.mubr.bf16.mxu0 %v445
        %1054 = vmatmul.mubr.bf16.gmra.mxu0 %v326
        %v1055 = vpop.f32.mrf.mxu0
        %v1056 = vadd.f32 %v628, %v1055
        %v1057 = vpop.f32.mrf.mxu0
        %v1058 = vpop.f32.mrf.mxu0
        %v1059 = vadd.f32 %v628, %v1058
        %v1060 = vpop.f32.mrf.mxu0
        %1061 = vdwg.mxu0
        %1062 = vmatprep.subr.bf16.mxu0 0
        %1063 = vmatpush1.bf16.msra.mxu0 %v876
        %1064 = vmatprep.subr.bf16.mxu0 0
        %1065 = vmatpush1.bf16.msra.mxu0 %v875
        %1066 = vmatprep.subr.bf16.mxu0 0
        %1067 = vmatpush1.bf16.msra.mxu0 %v874
        %1068 = vmatprep.subr.bf16.mxu0 0
        %1069 = vmatpush1.bf16.msra.mxu0 %v873
        %1070 = vmatprep.subr.bf16.mxu0 0
        %1071 = vmatpush1.bf16.msra.mxu0 %v872
        %1072 = vmatprep.subr.bf16.mxu0 0
        %1073 = vmatpush1.bf16.msra.mxu0 %v871
        %1074 = vmatprep.subr.bf16.mxu0 0
        %1075 = vmatpush1.bf16.msra.mxu0 %v870
        %1076 = vmatprep.subr.bf16.mxu0 0
        %1077 = vmatpush1.bf16.msra.mxu0 %v869
        %1078 = vmatprep.subr.bf16.mxu0 0
        %1079 = vmatpush2.bf16.msra.mxu0 %v884
        %1080 = vmatprep.subr.bf16.mxu0 0
        %1081 = vmatpush2.bf16.msra.mxu0 %v883
        %1082 = vmatprep.subr.bf16.mxu0 0
        %1083 = vmatpush2.bf16.msra.mxu0 %v882
        %1084 = vmatprep.subr.bf16.mxu0 0
        %1085 = vmatpush2.bf16.msra.mxu0 %v881
        %1086 = vmatprep.subr.bf16.mxu0 0
        %1087 = vmatpush2.bf16.msra.mxu0 %v880
        %1088 = vmatprep.subr.bf16.mxu0 0
        %1089 = vmatpush2.bf16.msra.mxu0 %v879
        %1090 = vmatprep.subr.bf16.mxu0 0
        %1091 = vmatpush2.bf16.msra.mxu0 %v878
        %1092 = vmatprep.subr.bf16.mxu0 0
        %1093 = vmatpush2.bf16.msra.mxu0 %v877
        %1094 = vmatprep.mubr.bf16.mxu0 %v355
        %1095 = vmatmul.mubr.bf16.gmra.mxu0 %v352
        %v1096 = vpop.f32.mrf.mxu0
        %v1097 = vadd.f32 %v1000, %v1096
        %v1098 = vpop.f32.mrf.mxu0
        %v1099 = vpop.f32.mrf.mxu0
        %v1100 = vadd.f32 %v1003, %v1099
        %v1101 = vpop.f32.mrf.mxu0
        %1102 = vmatprep.mubr.bf16.mxu0 %v370
        %1103 = vmatmul.mubr.bf16.gmra.mxu0 %v368
        %v1104 = vpop.f32.mrf.mxu0
        %v1105 = vadd.f32 %v1008, %v1104
        %v1106 = vpop.f32.mrf.mxu0
        %v1107 = vpop.f32.mrf.mxu0
        %v1108 = vadd.f32 %v1011, %v1107
        %v1109 = vpop.f32.mrf.mxu0
        %1110 = vmatprep.mubr.bf16.mxu0 %v382
        %1111 = vmatmul.mubr.bf16.gmra.mxu0 %v380
        %v1112 = vpop.f32.mrf.mxu0
        %v1113 = vadd.f32 %v1016, %v1112
        %v1114 = vpop.f32.mrf.mxu0
        %v1115 = vpop.f32.mrf.mxu0
        %v1116 = vadd.f32 %v1019, %v1115
        %v1117 = vpop.f32.mrf.mxu0
        %1118 = vmatprep.mubr.bf16.mxu0 %v394
        %1119 = vmatmul.mubr.bf16.gmra.mxu0 %v392
        %v1120 = vpop.f32.mrf.mxu0
        %v1121 = vadd.f32 %v1024, %v1120
        %v1122 = vpop.f32.mrf.mxu0
        %v1123 = vpop.f32.mrf.mxu0
        %v1124 = vadd.f32 %v1027, %v1123
        %v1125 = vpop.f32.mrf.mxu0
        %1126 = vmatprep.mubr.bf16.mxu0 %v410
        %1127 = vmatmul.mubr.bf16.gmra.mxu0 %v407
        %v1128 = vpop.f32.mrf.mxu0
        %v1129 = vadd.f32 %v1032, %v1128
        %v1130 = vpop.f32.mrf.mxu0
        %v1131 = vpop.f32.mrf.mxu0
        %v1132 = vadd.f32 %v1035, %v1131
        %v1133 = vpop.f32.mrf.mxu0
        %1134 = vmatprep.mubr.bf16.mxu0 %v425
        %1135 = vmatmul.mubr.bf16.gmra.mxu0 %v423
        %v1136 = vpop.f32.mrf.mxu0
        %v1137 = vadd.f32 %v1040, %v1136
        %v1138 = vpop.f32.mrf.mxu0
        %v1139 = vpop.f32.mrf.mxu0
        %v1140 = vadd.f32 %v1043, %v1139
        %v1141 = vpop.f32.mrf.mxu0
        %1142 = vmatprep.mubr.bf16.mxu0 %v437
        %1143 = vmatmul.mubr.bf16.gmra.mxu0 %v435
        %v1144 = vpop.f32.mrf.mxu0
        %v1145 = vadd.f32 %v1048, %v1144
        %v1146 = vpop.f32.mrf.mxu0
        %v1147 = vpop.f32.mrf.mxu0
        %v1148 = vadd.f32 %v1051, %v1147
        %v1149 = vpop.f32.mrf.mxu0
        %1150 = vmatprep.mubr.bf16.mxu0 %v449
        %1151 = vmatmul.mubr.bf16.gmra.mxu0 %v447
        %v1152 = vpop.f32.mrf.mxu0
        %v1153 = vadd.f32 %v1056, %v1152
        %v1154 = vpop.f32.mrf.mxu0
        %v1155 = vpop.f32.mrf.mxu0
        %v1156 = vadd.f32 %v1059, %v1155
        %v1157 = vpop.f32.mrf.mxu0
        %1158 = vdwg.mxu0
        %1159 = vmatprep.subr.bf16.mxu0 0
        %1160 = vmatpush1.bf16.msra.mxu0 %v892
        %1161 = vmatprep.subr.bf16.mxu0 0
        %1162 = vmatpush1.bf16.msra.mxu0 %v891
        %1163 = vmatprep.subr.bf16.mxu0 0
        %1164 = vmatpush1.bf16.msra.mxu0 %v890
        %1165 = vmatprep.subr.bf16.mxu0 0
        %1166 = vmatpush1.bf16.msra.mxu0 %v889
        %1167 = vmatprep.subr.bf16.mxu0 0
        %1168 = vmatpush1.bf16.msra.mxu0 %v888
        %1169 = vmatprep.subr.bf16.mxu0 0
        %1170 = vmatpush1.bf16.msra.mxu0 %v887
        %1171 = vmatprep.subr.bf16.mxu0 0
        %1172 = vmatpush1.bf16.msra.mxu0 %v886
        %1173 = vmatprep.subr.bf16.mxu0 0
        %1174 = vmatpush1.bf16.msra.mxu0 %v885
        %1175 = vmatprep.subr.bf16.mxu0 0
        %1176 = vmatpush2.bf16.msra.mxu0 %v900
        %1177 = vmatprep.subr.bf16.mxu0 0
        %1178 = vmatpush2.bf16.msra.mxu0 %v899
        %1179 = vmatprep.subr.bf16.mxu0 0
        %1180 = vmatpush2.bf16.msra.mxu0 %v898
        %1181 = vmatprep.subr.bf16.mxu0 0
        %1182 = vmatpush2.bf16.msra.mxu0 %v897
        %1183 = vmatprep.subr.bf16.mxu0 0
        %1184 = vmatpush2.bf16.msra.mxu0 %v896
        %1185 = vmatprep.subr.bf16.mxu0 0
        %1186 = vmatpush2.bf16.msra.mxu0 %v895
        %1187 = vmatprep.subr.bf16.mxu0 0
        %1188 = vmatpush2.bf16.msra.mxu0 %v894
        %1189 = vmatprep.subr.bf16.mxu0 0
        %1190 = vmatpush2.bf16.msra.mxu0 %v893
        %1191 = vmatprep.mubr.bf16.mxu0 %v361
        %1192 = vmatmul.mubr.bf16.gmra.mxu0 %v358
        %v1193 = vpop.f32.mrf.mxu0
        %v1194 = vadd.f32 %v1097, %v1193
        %v1195 = vpop.f32.mrf.mxu0
        %v1196 = vpop.f32.mrf.mxu0
        %v1197 = vadd.f32 %v1100, %v1196
        %v1198 = vpop.f32.mrf.mxu0
        %1199 = vmatprep.mubr.bf16.mxu0 %v374
        %1200 = vmatmul.mubr.bf16.gmra.mxu0 %v372
        %v1201 = vpop.f32.mrf.mxu0
        %v1202 = vadd.f32 %v1105, %v1201
        %v1203 = vpop.f32.mrf.mxu0
        %v1204 = vpop.f32.mrf.mxu0
        %v1205 = vadd.f32 %v1108, %v1204
        %v1206 = vpop.f32.mrf.mxu0
        %1207 = vmatprep.mubr.bf16.mxu0 %v386
        %1208 = vmatmul.mubr.bf16.gmra.mxu0 %v384
        %v1209 = vpop.f32.mrf.mxu0
        %v1210 = vadd.f32 %v1113, %v1209
        %v1211 = vpop.f32.mrf.mxu0
        %v1212 = vpop.f32.mrf.mxu0
        %v1213 = vadd.f32 %v1116, %v1212
        %v1214 = vpop.f32.mrf.mxu0
        %1215 = vmatprep.mubr.bf16.mxu0 %v398
        %1216 = vmatmul.mubr.bf16.gmra.mxu0 %v396
        %v1217 = vpop.f32.mrf.mxu0
        %v1218 = vadd.f32 %v1121, %v1217
        %v1219 = vpop.f32.mrf.mxu0
        %v1220 = vpop.f32.mrf.mxu0
        %v1221 = vadd.f32 %v1124, %v1220
        %v1222 = vpop.f32.mrf.mxu0
        %1223 = vmatprep.mubr.bf16.mxu0 %v416
        %1224 = vmatmul.mubr.bf16.gmra.mxu0 %v413
        %v1225 = vpop.f32.mrf.mxu0
        %v1226 = vadd.f32 %v1129, %v1225
        %v1227 = vpop.f32.mrf.mxu0
        %v1228 = vpop.f32.mrf.mxu0
        %v1229 = vadd.f32 %v1132, %v1228
        %v1230 = vpop.f32.mrf.mxu0
        %1231 = vmatprep.mubr.bf16.mxu0 %v429
        %1232 = vmatmul.mubr.bf16.gmra.mxu0 %v427
        %v1233 = vpop.f32.mrf.mxu0
        %v1234 = vadd.f32 %v1137, %v1233
        %v1235 = vpop.f32.mrf.mxu0
        %v1236 = vpop.f32.mrf.mxu0
        %v1237 = vadd.f32 %v1140, %v1236
        %v1238 = vpop.f32.mrf.mxu0
        %1239 = vmatprep.mubr.bf16.mxu0 %v441
        %1240 = vmatmul.mubr.bf16.gmra.mxu0 %v439
        %v1241 = vpop.f32.mrf.mxu0
        %v1242 = vadd.f32 %v1145, %v1241
        %v1243 = vpop.f32.mrf.mxu0
        %v1244 = vpop.f32.mrf.mxu0
        %v1245 = vadd.f32 %v1148, %v1244
        %v1246 = vpop.f32.mrf.mxu0
        %1247 = vmatprep.mubr.bf16.mxu0 %v453
        %1248 = vmatmul.mubr.bf16.gmra.mxu0 %v451
        %v1249 = vpop.f32.mrf.mxu0
        %v1250 = vadd.f32 %v1153, %v1249
        %v1251 = vpop.f32.mrf.mxu0
        %v1252 = vpop.f32.mrf.mxu0
        %v1253 = vadd.f32 %v1156, %v1252
        %v1254 = vpop.f32.mrf.mxu0
        %1255 = vdwg.mxu0
        %1256 = vmatprep.subr.bf16.mxu0 0
        %1257 = vmatpush1.bf16.msra.mxu0 %v908
        %1258 = vmatprep.subr.bf16.mxu0 0
        %1259 = vmatpush1.bf16.msra.mxu0 %v907
        %1260 = vmatprep.subr.bf16.mxu0 0
        %1261 = vmatpush1.bf16.msra.mxu0 %v906
        %1262 = vmatprep.subr.bf16.mxu0 0
        %1263 = vmatpush1.bf16.msra.mxu0 %v905
        %1264 = vmatprep.subr.bf16.mxu0 0
        %1265 = vmatpush1.bf16.msra.mxu0 %v904
        %1266 = vmatprep.subr.bf16.mxu0 0
        %1267 = vmatpush1.bf16.msra.mxu0 %v903
        %1268 = vmatprep.subr.bf16.mxu0 0
        %1269 = vmatpush1.bf16.msra.mxu0 %v902
        %1270 = vmatprep.subr.bf16.mxu0 0
        %1271 = vmatpush1.bf16.msra.mxu0 %v901
        %1272 = vmatprep.subr.bf16.mxu0 0
        %1273 = vmatpush2.bf16.msra.mxu0 0
        %1274 = vmatprep.subr.bf16.mxu0 0
        %1275 = vmatpush2.bf16.msra.mxu0 0
        %1276 = vmatprep.subr.bf16.mxu0 0
        %1277 = vmatpush2.bf16.msra.mxu0 0
        %1278 = vmatprep.subr.bf16.mxu0 0
        %1279 = vmatpush2.bf16.msra.mxu0 0
        %1280 = vmatprep.subr.bf16.mxu0 0
        %1281 = vmatpush2.bf16.msra.mxu0 0
        %1282 = vmatprep.subr.bf16.mxu0 0
        %1283 = vmatpush2.bf16.msra.mxu0 0
        %1284 = vmatprep.subr.bf16.mxu0 0
        %1285 = vmatpush2.bf16.msra.mxu0 0
        %1286 = vmatprep.subr.bf16.mxu0 0
        %1287 = vmatpush2.bf16.msra.mxu0 0
        %1288 = vmatprep.mubr.bf16.mxu0 0
        %1289 = vmatmul.mubr.bf16.gmra.mxu0 %v364
        %v1290 = vpop.f32.mrf.mxu0
        %v1291 = vadd.f32 %v1194, %v1290
        %v1292 = vpop.f32.mrf.mxu0
        %v1293 = vpop.f32.mrf.mxu0
        %v1294 = vadd.f32 %v1197, %v1293
        %v1295 = vpop.f32.mrf.mxu0
        %1296 = vmatprep.mubr.bf16.mxu0 0
        %1297 = vmatmul.mubr.bf16.gmra.mxu0 %v376
        %v1298 = vpop.f32.mrf.mxu0
        %v1299 = vadd.f32 %v1202, %v1298
        %v1300 = vpop.f32.mrf.mxu0
        %v1301 = vpop.f32.mrf.mxu0
        %v1302 = vadd.f32 %v1205, %v1301
        %v1303 = vpop.f32.mrf.mxu0
        %1304 = vmatprep.mubr.bf16.mxu0 0
        %1305 = vmatmul.mubr.bf16.gmra.mxu0 %v388
        %v1306 = vpop.f32.mrf.mxu0
        %v1307 = vadd.f32 %v1210, %v1306
        %v1308 = vpop.f32.mrf.mxu0
        %v1309 = vpop.f32.mrf.mxu0
        %v1310 = vadd.f32 %v1213, %v1309
        %v1311 = vpop.f32.mrf.mxu0
        %1312 = vmatprep.mubr.bf16.mxu0 0
        %1313 = vmatmul.mubr.bf16.gmra.mxu0 %v400
        %v1314 = vpop.f32.mrf.mxu0
        %v1315 = vadd.f32 %v1218, %v1314
        %v1316 = vpop.f32.mrf.mxu0
        %v1317 = vpop.f32.mrf.mxu0
        %v1318 = vadd.f32 %v1221, %v1317
        %v1319 = vpop.f32.mrf.mxu0
        %1320 = vmatprep.mubr.bf16.mxu0 0
        %1321 = vmatmul.mubr.bf16.gmra.mxu0 %v419
        %v1322 = vpop.f32.mrf.mxu0
        %v1323 = vadd.f32 %v1226, %v1322
        %v1324 = vpop.f32.mrf.mxu0
        %v1325 = vpop.f32.mrf.mxu0
        %v1326 = vadd.f32 %v1229, %v1325
        %v1327 = vpop.f32.mrf.mxu0
        %1328 = vmatprep.mubr.bf16.mxu0 0
        %1329 = vmatmul.mubr.bf16.gmra.mxu0 %v431
        %v1330 = vpop.f32.mrf.mxu0
        %v1331 = vadd.f32 %v1234, %v1330
        %v1332 = vpop.f32.mrf.mxu0
        %v1333 = vpop.f32.mrf.mxu0
        %v1334 = vadd.f32 %v1237, %v1333
        %v1335 = vpop.f32.mrf.mxu0
        %1336 = vmatprep.mubr.bf16.mxu0 0
        %1337 = vmatmul.mubr.bf16.gmra.mxu0 %v443
        %v1338 = vpop.f32.mrf.mxu0
        %v1339 = vadd.f32 %v1242, %v1338
        %v1340 = vpop.f32.mrf.mxu0
        %v1341 = vpop.f32.mrf.mxu0
        %v1342 = vadd.f32 %v1245, %v1341
        %v1343 = vpop.f32.mrf.mxu0
        %1344 = vmatprep.mubr.bf16.mxu0 0
        %1345 = vmatmul.mubr.bf16.gmra.mxu0 %v455
        %v1346 = vpop.f32.mrf.mxu0
        %v1347 = vadd.f32 %v1250, %v1346
        %v1348 = vpop.f32.mrf.mxu0
        %v1349 = vpop.f32.mrf.mxu0
        %v1350 = vadd.f32 %v1253, %v1349
        %v1351 = vpop.f32.mrf.mxu0
        %1352 = vdwg.mxu0
        %v1353 = vmul.f32 %v1291, %v1291
        %v1354 = vmul.f32 %v1294, %v1294
        %v1355 = vmul.f32 %v1299, %v1299
        %v1356 = vmul.f32 %v1302, %v1302
        %v1357 = vmul.f32 %v1307, %v1307
        %v1358 = vmul.f32 %v1310, %v1310
        %v1359 = vmul.f32 %v1315, %v1315
        %v1360 = vmul.f32 %v1318, %v1318
        %v1361 = vmul.f32 %v1323, %v1323
        %v1362 = vmul.f32 %v1326, %v1326
        %v1363 = vmul.f32 %v1331, %v1331
        %v1364 = vmul.f32 %v1334, %v1334
        %v1365 = vmul.f32 %v1339, %v1339
        %v1366 = vmul.f32 %v1342, %v1342
        %v1367 = vmul.f32 %v1347, %v1347
        %v1368 = vmul.f32 %v1350, %v1350
        %v1369 = vmul.f32 %v1291, %v1353
        %v1370 = vmul.f32 %v1294, %v1354
        %v1371 = vmul.f32 %v1299, %v1355
        %v1372 = vmul.f32 %v1302, %v1356
        %v1373 = vmul.f32 %v1307, %v1357
        %v1374 = vmul.f32 %v1310, %v1358
        %v1375 = vmul.f32 %v1315, %v1359
        %v1376 = vmul.f32 %v1318, %v1360
        %v1377 = vmul.f32 %v1323, %v1361
        %v1378 = vmul.f32 %v1326, %v1362
        %v1379 = vmul.f32 %v1331, %v1363
        %v1380 = vmul.f32 %v1334, %v1364
        %v1381 = vmul.f32 %v1339, %v1365
        %v1382 = vmul.f32 %v1342, %v1366
        %v1383 = vmul.f32 %v1347, %v1367
        %v1384 = vmul.f32 %v1350, %v1368
        %v1385 = vmul.f32 %v1369, 0.044715
        %v1386 = vmul.f32 %v1370, 0.044715
        %v1387 = vmul.f32 %v1371, 0.044715
        %v1388 = vmul.f32 %v1372, 0.044715
        %v1389 = vmul.f32 %v1373, 0.044715
        %v1390 = vmul.f32 %v1374, 0.044715
        %v1391 = vmul.f32 %v1375, 0.044715
        %v1392 = vmul.f32 %v1376, 0.044715
        %v1393 = vmul.f32 %v1377, 0.044715
        %v1394 = vmul.f32 %v1378, 0.044715
        %v1395 = vmul.f32 %v1379, 0.044715
        %v1396 = vmul.f32 %v1380, 0.044715
        %v1397 = vmul.f32 %v1381, 0.044715
        %v1398 = vmul.f32 %v1382, 0.044715
        %v1399 = vmul.f32 %v1383, 0.044715
        %v1400 = vmul.f32 %v1384, 0.044715
        %v1401 = vadd.f32 %v1291, %v1385
        %v1402 = vadd.f32 %v1294, %v1386
        %v1403 = vadd.f32 %v1299, %v1387
        %v1404 = vadd.f32 %v1302, %v1388
        %v1405 = vadd.f32 %v1307, %v1389
        %v1406 = vadd.f32 %v1310, %v1390
        %v1407 = vadd.f32 %v1315, %v1391
        %v1408 = vadd.f32 %v1318, %v1392
        %v1409 = vadd.f32 %v1323, %v1393
        %v1410 = vadd.f32 %v1326, %v1394
        %v1411 = vadd.f32 %v1331, %v1395
        %v1412 = vadd.f32 %v1334, %v1396
        %v1413 = vadd.f32 %v1339, %v1397
        %v1414 = vadd.f32 %v1342, %v1398
        %v1415 = vadd.f32 %v1347, %v1399
        %v1416 = vadd.f32 %v1350, %v1400
        %v1417 = vmul.f32 %v1401, 0.7978846
        %v1418 = vmul.f32 %v1402, 0.7978846
        %v1419 = vmul.f32 %v1403, 0.7978846
        %v1420 = vmul.f32 %v1404, 0.7978846
        %v1421 = vmul.f32 %v1405, 0.7978846
        %v1422 = vmul.f32 %v1406, 0.7978846
        %v1423 = vmul.f32 %v1407, 0.7978846
        %v1424 = vmul.f32 %v1408, 0.7978846
        %v1425 = vmul.f32 %v1409, 0.7978846
        %v1426 = vmul.f32 %v1410, 0.7978846
        %v1427 = vmul.f32 %v1411, 0.7978846
        %v1428 = vmul.f32 %v1412, 0.7978846
        %v1429 = vmul.f32 %v1413, 0.7978846
        %v1430 = vmul.f32 %v1414, 0.7978846
        %v1431 = vmul.f32 %v1415, 0.7978846
        %v1432 = vmul.f32 %v1416, 0.7978846
        %v1433 = vtanh.pop %v1417
        %v1434 = vtanh.pop %v1418
        %v1435 = vtanh.pop %v1419
        %v1436 = vtanh.pop %v1420
        %v1437 = vtanh.pop %v1421
        %v1438 = vtanh.pop %v1422
        %v1439 = vtanh.pop %v1423
        %v1440 = vtanh.pop %v1424
        %v1441 = vtanh.pop %v1425
        %v1442 = vtanh.pop %v1426
        %v1443 = vtanh.pop %v1427
        %v1444 = vtanh.pop %v1428
        %v1445 = vtanh.pop %v1429
        %v1446 = vtanh.pop %v1430
        %v1447 = vtanh.pop %v1431
        %v1448 = vtanh.pop %v1432
        %v1449 = vadd.f32 %v1433, 1.0
        %v1450 = vadd.f32 %v1434, 1.0
        %v1451 = vadd.f32 %v1435, 1.0
        %v1452 = vadd.f32 %v1436, 1.0
        %v1453 = vadd.f32 %v1437, 1.0
        %v1454 = vadd.f32 %v1438, 1.0
        %v1455 = vadd.f32 %v1439, 1.0
        %v1456 = vadd.f32 %v1440, 1.0
        %v1457 = vadd.f32 %v1441, 1.0
        %v1458 = vadd.f32 %v1442, 1.0
        %v1459 = vadd.f32 %v1443, 1.0
        %v1460 = vadd.f32 %v1444, 1.0
        %v1461 = vadd.f32 %v1445, 1.0
        %v1462 = vadd.f32 %v1446, 1.0
        %v1463 = vadd.f32 %v1447, 1.0
        %v1464 = vadd.f32 %v1448, 1.0
        %v1465 = vmul.f32 %v1449, 0.5
        %v1466 = vmul.f32 %v1450, 0.5
        %v1467 = vmul.f32 %v1451, 0.5
        %v1468 = vmul.f32 %v1452, 0.5
        %v1469 = vmul.f32 %v1453, 0.5
        %v1470 = vmul.f32 %v1454, 0.5
        %v1471 = vmul.f32 %v1455, 0.5
        %v1472 = vmul.f32 %v1456, 0.5
        %v1473 = vmul.f32 %v1457, 0.5
        %v1474 = vmul.f32 %v1458, 0.5
        %v1475 = vmul.f32 %v1459, 0.5
        %v1476 = vmul.f32 %v1460, 0.5
        %v1477 = vmul.f32 %v1461, 0.5
        %v1478 = vmul.f32 %v1462, 0.5
        %v1479 = vmul.f32 %v1463, 0.5
        %v1480 = vmul.f32 %v1464, 0.5
        %v1481 = vmul.f32 %v1291, %v1465
        %v1482 = vmul.f32 %v1294, %v1466
        %v1483 = vmul.f32 %v1299, %v1467
        %v1484 = vmul.f32 %v1302, %v1468
        %v1485 = vmul.f32 %v1307, %v1469
        %v1486 = vmul.f32 %v1310, %v1470
        %v1487 = vmul.f32 %v1315, %v1471
        %v1488 = vmul.f32 %v1318, %v1472
        %v1489 = vmul.f32 %v1323, %v1473
        %v1490 = vmul.f32 %v1326, %v1474
        %v1491 = vmul.f32 %v1331, %v1475
        %v1492 = vmul.f32 %v1334, %v1476
        %v1493 = vmul.f32 %v1339, %v1477
        %v1494 = vmul.f32 %v1342, %v1478
        %v1495 = vmul.f32 %v1347, %v1479
        %v1496 = vmul.f32 %v1350, %v1480
        %v1497 = vadd.f32 %v208, %v1481
        %v1498 = vadd.f32 %v209, %v1482
        %v1499 = vadd.f32 %v210, %v1483
        %v1500 = vadd.f32 %v211, %v1484
        %v1501 = vadd.f32 %v212, %v1485
        %v1502 = vadd.f32 %v213, %v1486
        %v1503 = vadd.f32 %v214, %v1487
        %v1504 = vadd.f32 %v215, %v1488
        %v1505 = vadd.f32 %v216, %v1489
        %v1506 = vadd.f32 %v217, %v1490
        %v1507 = vadd.f32 %v218, %v1491
        %v1508 = vadd.f32 %v219, %v1492
        %v1509 = vadd.f32 %v220, %v1493
        %v1510 = vadd.f32 %v221, %v1494
        %v1511 = vadd.f32 %v222, %v1495
        %v1512 = vadd.f32 %v223, %v1496
        %v1513 = vpack.c.bf16 %v1498, %v1497
        %v1514 = vpack.c.bf16 %v1500, %v1499
        %v1515 = vpack.c.bf16 %v1502, %v1501
        %v1516 = vpack.c.bf16 %v1504, %v1503
        %v1517 = vpack.c.bf16 %v1506, %v1505
        %v1518 = vpack.c.bf16 %v1508, %v1507
        %v1519 = vpack.c.bf16 %v1510, %v1509
        %v1520 = vpack.c.bf16 %v1512, %v1511
        %v1529 = vrot.slane %v1513, 1
        %v1530 = vsel %vm241, %v242, %v1529
        %v1531 = vrot.slane %v1514, 1
        %v1532 = vsel %vm241, %v1529, %v1531
        %v1533 = vrot.slane %v1515, 1
        %v1534 = vsel %vm241, %v1531, %v1533
        %v1535 = vrot.slane %v1516, 1
        %v1536 = vsel %vm241, %v1533, %v1535
        %v1537 = vrot.slane %v1517, 1
        %v1538 = vsel %vm241, %v242, %v1537
        %v1539 = vrot.slane %v1518, 1
        %v1540 = vsel %vm241, %v1537, %v1539
        %v1541 = vrot.slane %v1519, 1
        %v1542 = vsel %vm241, %v1539, %v1541
        %v1543 = vrot.slane %v1520, 1
        %v1544 = vsel %vm241, %v1541, %v1543
        %v1545 = vrot.slane %v1513, 2
        %v1546 = vsel %vm259, %v260, %v1545
        %v1547 = vrot.slane %v1514, 2
        %v1548 = vsel %vm259, %v1545, %v1547
        %v1549 = vrot.slane %v1515, 2
        %v1550 = vsel %vm259, %v1547, %v1549
        %v1551 = vrot.slane %v1516, 2
        %v1552 = vsel %vm259, %v1549, %v1551
        %v1553 = vrot.slane %v1517, 2
        %v1554 = vsel %vm259, %v260, %v1553
        %v1555 = vrot.slane %v1518, 2
        %v1556 = vsel %vm259, %v1553, %v1555
        %v1557 = vrot.slane %v1519, 2
        %v1558 = vsel %vm259, %v1555, %v1557
        %v1559 = vrot.slane %v1520, 2
        %v1560 = vsel %vm259, %v1557, %v1559
        %v1561 = vrot.slane %v1513, 3
        %v1562 = vrot.slane %v1514, 3
        %v1563 = vsel %vm277, %v1561, %v1562
        %v1564 = vrot.slane %v1515, 3
        %v1565 = vsel %vm277, %v1562, %v1564
        %v1566 = vrot.slane %v1516, 3
        %v1567 = vsel %vm277, %v1564, %v1566
        %v1568 = vrot.slane %v1517, 3
        %v1569 = vrot.slane %v1518, 3
        %v1570 = vsel %vm277, %v1568, %v1569
        %v1571 = vrot.slane %v1519, 3
        %v1572 = vsel %vm277, %v1569, %v1571
        %v1573 = vrot.slane %v1520, 3
        %v1574 = vsel %vm277, %v1571, %v1573
        %v1575 = vrot.slane %v1513, 4
        %v1576 = vrot.slane %v1514, 4
        %v1577 = vsel %vm292, %v1575, %v1576
        %v1578 = vrot.slane %v1515, 4
        %v1579 = vsel %vm292, %v1576, %v1578
        %v1580 = vrot.slane %v1516, 4
        %v1581 = vsel %vm292, %v1578, %v1580
        %v1582 = vsel %vm292, %v1580, %v300
        %v1583 = vrot.slane %v1517, 4
        %v1584 = vrot.slane %v1518, 4
        %v1585 = vsel %vm292, %v1583, %v1584
        %v1586 = vrot.slane %v1519, 4
        %v1587 = vsel %vm292, %v1584, %v1586
        %v1588 = vrot.slane %v1520, 4
        %v1589 = vsel %vm292, %v1586, %v1588
        %v1590 = vsel %vm292, %v1588, %v300
        %v1591 = vrot.slane %v1513, 5
        %v1592 = vrot.slane %v1514, 5
        %v1593 = vsel %vm310, %v1591, %v1592
        %v1594 = vrot.slane %v1515, 5
        %v1595 = vsel %vm310, %v1592, %v1594
        %v1596 = vrot.slane %v1516, 5
        %v1597 = vsel %vm310, %v1594, %v1596
        %v1598 = vsel %vm310, %v1596, %v318
        %v1599 = vrot.slane %v1517, 5
        %v1600 = vrot.slane %v1518, 5
        %v1601 = vsel %vm310, %v1599, %v1600
        %v1602 = vrot.slane %v1519, 5
        %v1603 = vsel %vm310, %v1600, %v1602
        %v1604 = vrot.slane %v1520, 5
        %v1605 = vsel %vm310, %v1602, %v1604
        %v1606 = vsel %vm310, %v1604, %v318
        %v1607 = vrot.slane %v1513, 6
        %v1608 = vrot.slane %v1514, 6
        %v1609 = vsel %vm328, %v1607, %v1608
        %v1610 = vrot.slane %v1515, 6
        %v1611 = vsel %vm328, %v1608, %v1610
        %v1612 = vrot.slane %v1516, 6
        %v1613 = vsel %vm328, %v1610, %v1612
        %v1614 = vsel %vm328, %v1612, %v336
        %v1615 = vrot.slane %v1517, 6
        %v1616 = vrot.slane %v1518, 6
        %v1617 = vsel %vm328, %v1615, %v1616
        %v1618 = vrot.slane %v1519, 6
        %v1619 = vsel %vm328, %v1616, %v1618
        %v1620 = vrot.slane %v1520, 6
        %v1621 = vsel %vm328, %v1618, %v1620
        %v1622 = vsel %vm328, %v1620, %v336
        %v1623 = vsel %vm310, %v318, %v1591
        %v1624 = vrot.slane %v1530, 5
        %v1625 = vrot.slane %v1532, 5
        %v1626 = vsel %vm310, %v1624, %v1625
        %v1627 = vrot.slane %v1546, 5
        %v1628 = vrot.slane %v1548, 5
        %v1629 = vsel %vm310, %v1627, %v1628
        %v1630 = vrot.slane %v1561, 5
        %v1631 = vrot.slane %v1563, 5
        %v1632 = vsel %vm310, %v1630, %v1631
        %v1633 = vrot.slane %v1575, 5
        %v1634 = vrot.slane %v1577, 5
        %v1635 = vsel %vm310, %v1633, %v1634
        %v1636 = vrot.slane %v1591, 5
        %v1637 = vrot.slane %v1593, 5
        %v1638 = vsel %vm310, %v1636, %v1637
        %v1639 = vrot.slane %v1607, 5
        %v1640 = vrot.slane %v1609, 5
        %v1641 = vsel %vm310, %v1639, %v1640
        %v1642 = vrot.slane %v1534, 5
        %v1643 = vsel %vm310, %v1625, %v1642
        %v1644 = vrot.slane %v1550, 5
        %v1645 = vsel %vm310, %v1628, %v1644
        %v1646 = vrot.slane %v1565, 5
        %v1647 = vsel %vm310, %v1631, %v1646
        %v1648 = vrot.slane %v1579, 5
        %v1649 = vsel %vm310, %v1634, %v1648
        %v1650 = vrot.slane %v1595, 5
        %v1651 = vsel %vm310, %v1637, %v1650
        %v1652 = vrot.slane %v1611, 5
        %v1653 = vsel %vm310, %v1640, %v1652
        %v1654 = vrot.slane %v1536, 5
        %v1655 = vsel %vm310, %v1642, %v1654
        %v1656 = vrot.slane %v1552, 5
        %v1657 = vsel %vm310, %v1644, %v1656
        %v1658 = vrot.slane %v1567, 5
        %v1659 = vsel %vm310, %v1646, %v1658
        %v1660 = vrot.slane %v1581, 5
        %v1661 = vsel %vm310, %v1648, %v1660
        %v1662 = vrot.slane %v1597, 5
        %v1663 = vsel %vm310, %v1650, %v1662
        %v1664 = vrot.slane %v1613, 5
        %v1665 = vsel %vm310, %v1652, %v1664
        %v1666 = vrot.slane %v1535, 5
        %v1667 = vsel %vm310, %v1654, %v1666
        %v1668 = vrot.slane %v1551, 5
        %v1669 = vsel %vm310, %v1656, %v1668
        %v1670 = vrot.slane %v1566, 5
        %v1671 = vsel %vm310, %v1658, %v1670
        %v1672 = vrot.slane %v1582, 5
        %v1673 = vsel %vm310, %v1660, %v1672
        %v1674 = vrot.slane %v1598, 5
        %v1675 = vsel %vm310, %v1662, %v1674
        %v1676 = vrot.slane %v1614, 5
        %v1677 = vsel %vm310, %v1664, %v1676
        %v1678 = vsel %vm310, %v318, %v1599
        %v1679 = vrot.slane %v1538, 5
        %v1680 = vrot.slane %v1540, 5
        %v1681 = vsel %vm310, %v1679, %v1680
        %v1682 = vrot.slane %v1554, 5
        %v1683 = vrot.slane %v1556, 5
        %v1684 = vsel %vm310, %v1682, %v1683
        %v1685 = vrot.slane %v1568, 5
        %v1686 = vrot.slane %v1570, 5
        %v1687 = vsel %vm310, %v1685, %v1686
        %v1688 = vrot.slane %v1583, 5
        %v1689 = vrot.slane %v1585, 5
        %v1690 = vsel %vm310, %v1688, %v1689
        %v1691 = vrot.slane %v1599, 5
        %v1692 = vrot.slane %v1601, 5
        %v1693 = vsel %vm310, %v1691, %v1692
        %v1694 = vrot.slane %v1615, 5
        %v1695 = vrot.slane %v1617, 5
        %v1696 = vsel %vm310, %v1694, %v1695
        %v1697 = vrot.slane %v1542, 5
        %v1698 = vsel %vm310, %v1680, %v1697
        %v1699 = vrot.slane %v1558, 5
        %v1700 = vsel %vm310, %v1683, %v1699
        %v1701 = vrot.slane %v1572, 5
        %v1702 = vsel %vm310, %v1686, %v1701
        %v1703 = vrot.slane %v1587, 5
        %v1704 = vsel %vm310, %v1689, %v1703
        %v1705 = vrot.slane %v1603, 5
        %v1706 = vsel %vm310, %v1692, %v1705
        %v1707 = vrot.slane %v1619, 5
        %v1708 = vsel %vm310, %v1695, %v1707
        %v1709 = vrot.slane %v1544, 5
        %v1710 = vsel %vm310, %v1697, %v1709
        %v1711 = vrot.slane %v1560, 5
        %v1712 = vsel %vm310, %v1699, %v1711
        %v1713 = vrot.slane %v1574, 5
        %v1714 = vsel %vm310, %v1701, %v1713
        %v1715 = vrot.slane %v1589, 5
        %v1716 = vsel %vm310, %v1703, %v1715
        %v1717 = vrot.slane %v1605, 5
        %v1718 = vsel %vm310, %v1705, %v1717
        %v1719 = vrot.slane %v1621, 5
        %v1720 = vsel %vm310, %v1707, %v1719
        %v1721 = vrot.slane %v1543, 5
        %v1722 = vsel %vm310, %v1709, %v1721
        %v1723 = vrot.slane %v1559, 5
        %v1724 = vsel %vm310, %v1711, %v1723
        %v1725 = vrot.slane %v1573, 5
        %v1726 = vsel %vm310, %v1713, %v1725
        %v1727 = vrot.slane %v1590, 5
        %v1728 = vsel %vm310, %v1715, %v1727
        %v1729 = vrot.slane %v1606, 5
        %v1730 = vsel %vm310, %v1717, %v1729
        %v1731 = vrot.slane %v1622, 5
        %v1732 = vsel %vm310, %v1719, %v1731
        %s1789 = scalar_lea.vmem [#allocation5], 448
        %v1790 = vld [vmem:[%s1789] sm:$0xf]
        %v1791 = vld [vmem:[%s1789 + $0x4] sm:$0xf]
        %v1792 = vld [vmem:[%s1789 + $0x8] sm:$0xf]
        %v1793 = vld [vmem:[%s1789 + $0xc] sm:$0xf]
        %v1794 = vld [vmem:[%s1789 + $0x10] sm:$0xf]
        %v1795 = vld [vmem:[%s1789 + $0x14] sm:$0xf]
        %v1796 = vld [vmem:[%s1789 + $0x18] sm:$0xf]
        %v1797 = vld [vmem:[%s1789 + $0x1c] sm:$0xf]
        %v1798 = vld [vmem:[%s1789 + $0x20] sm:$0xf]
        %v1799 = vld [vmem:[%s1789 + $0x24] sm:$0xf]
        %v1800 = vld [vmem:[%s1789 + $0x28] sm:$0xf]
        %v1801 = vld [vmem:[%s1789 + $0x2c] sm:$0xf]
        %v1802 = vld [vmem:[%s1789 + $0x30] sm:$0xf]
        %v1803 = vld [vmem:[%s1789 + $0x34] sm:$0xf]
        %v1804 = vld [vmem:[%s1789 + $0x38] sm:$0xf]
        %v1805 = vld [vmem:[%s1789 + $0x3c] sm:$0xf]
        %v1806 = vld [vmem:[%s1789 + $0x40] sm:$0xf]
        %v1807 = vld [vmem:[%s1789 + $0x44] sm:$0xf]
        %v1808 = vld [vmem:[%s1789 + $0x48] sm:$0xf]
        %v1809 = vld [vmem:[%s1789 + $0x4c] sm:$0xf]
        %v1810 = vld [vmem:[%s1789 + $0x50] sm:$0xf]
        %v1811 = vld [vmem:[%s1789 + $0x54] sm:$0xf]
        %v1812 = vld [vmem:[%s1789 + $0x58] sm:$0xf]
        %v1813 = vld [vmem:[%s1789 + $0x5c] sm:$0xf]
        %v1814 = vld [vmem:[%s1789 + $0x60] sm:$0xf]
        %v1815 = vld [vmem:[%s1789 + $0x64] sm:$0xf]
        %v1816 = vld [vmem:[%s1789 + $0x68] sm:$0xf]
        %v1817 = vld [vmem:[%s1789 + $0x6c] sm:$0xf]
        %v1818 = vld [vmem:[%s1789 + $0x70] sm:$0xf]
        %v1819 = vld [vmem:[%s1789 + $0x74] sm:$0xf]
        %v1820 = vld [vmem:[%s1789 + $0x78] sm:$0xf]
        %v1821 = vld [vmem:[%s1789 + $0x7c] sm:$0xf]
        %v1822 = vld [vmem:[%s1789 + $0x80] sm:$0xf]
        %v1823 = vld [vmem:[%s1789 + $0x84] sm:$0xf]
        %v1824 = vld [vmem:[%s1789 + $0x88] sm:$0xf]
        %v1825 = vld [vmem:[%s1789 + $0x8c] sm:$0xf]
        %v1826 = vld [vmem:[%s1789 + $0x90] sm:$0xf]
        %v1827 = vld [vmem:[%s1789 + $0x94] sm:$0xf]
        %v1828 = vld [vmem:[%s1789 + $0x98] sm:$0xf]
        %v1829 = vld [vmem:[%s1789 + $0x9c] sm:$0xf]
        %v1830 = vld [vmem:[%s1789 + $0xa0] sm:$0xf]
        %v1831 = vld [vmem:[%s1789 + $0xa4] sm:$0xf]
        %v1832 = vld [vmem:[%s1789 + $0xa8] sm:$0xf]
        %v1833 = vld [vmem:[%s1789 + $0xac] sm:$0xf]
        %v1834 = vld [vmem:[%s1789 + $0xb0] sm:$0xf]
        %v1835 = vld [vmem:[%s1789 + $0xb4] sm:$0xf]
        %v1836 = vld [vmem:[%s1789 + $0xb8] sm:$0xf]
        %v1837 = vld [vmem:[%s1789 + $0xbc] sm:$0xf]
        %v1838 = vld [vmem:[%s1789 + $0xc0] sm:$0xf]
        %v1839 = vld [vmem:[%s1789 + $0xc4] sm:$0xf]
        %v1840 = vld [vmem:[%s1789 + $0xc8] sm:$0xf]
        %v1841 = vld [vmem:[%s1789 + $0xcc] sm:$0xf]
        %v1842 = vld [vmem:[%s1789 + $0xd0] sm:$0xf]
        %v1843 = vld [vmem:[%s1789 + $0xd4] sm:$0xf]
        %v1844 = vld [vmem:[%s1789 + $0xd8] sm:$0xf]
        %v1845 = vld [vmem:[%s1789 + $0xdc] sm:$0xf]
        %v1846 = vld [vmem:[%s1789 + $0xe0] sm:$0xf]
        %v1847 = vld [vmem:[%s1789 + $0xe4] sm:$0xf]
        %v1848 = vld [vmem:[%s1789 + $0xe8] sm:$0xf]
        %v1849 = vld [vmem:[%s1789 + $0xec] sm:$0xf]
        %v1850 = vld [vmem:[%s1789 + $0xf0] sm:$0xf]
        %v1851 = vld [vmem:[%s1789 + $0xf4] sm:$0xf]
        %v1852 = vld [vmem:[%s1789 + $0xf8] sm:$0xf]
        %v1853 = vld [vmem:[%s1789 + $0xfc] sm:$0xf]
        %v1854 = vld [vmem:[%s1789 + $0x100] sm:$0xf]
        %v1855 = vld [vmem:[%s1789 + $0x104] sm:$0xf]
        %v1856 = vld [vmem:[%s1789 + $0x108] sm:$0xf]
        %v1857 = vld [vmem:[%s1789 + $0x10c] sm:$0xf]
        %v1858 = vld [vmem:[%s1789 + $0x110] sm:$0xf]
        %v1859 = vld [vmem:[%s1789 + $0x114] sm:$0xf]
        %v1860 = vld [vmem:[%s1789 + $0x118] sm:$0xf]
        %v1861 = vld [vmem:[%s1789 + $0x11c] sm:$0xf]
        %v1862 = vld [vmem:[%s1789 + $0x120] sm:$0xf]
        %v1863 = vld [vmem:[%s1789 + $0x124] sm:$0xf]
        %v1864 = vld [vmem:[%s1789 + $0x128] sm:$0xf]
        %v1865 = vld [vmem:[%s1789 + $0x12c] sm:$0xf]
        %v1866 = vld [vmem:[%s1789 + $0x130] sm:$0xf]
        %v1867 = vld [vmem:[%s1789 + $0x134] sm:$0xf]
        %v1868 = vld [vmem:[%s1789 + $0x138] sm:$0xf]
        %v1869 = vld [vmem:[%s1789 + $0x13c] sm:$0xf]
        %v1870 = vld [vmem:[%s1789 + $0x140] sm:$0xf]
        %v1871 = vld [vmem:[%s1789 + $0x144] sm:$0xf]
        %v1872 = vld [vmem:[%s1789 + $0x148] sm:$0xf]
        %v1873 = vld [vmem:[%s1789 + $0x14c] sm:$0xf]
        %v1874 = vld [vmem:[%s1789 + $0x150] sm:$0xf]
        %v1875 = vld [vmem:[%s1789 + $0x154] sm:$0xf]
        %v1876 = vld [vmem:[%s1789 + $0x158] sm:$0xf]
        %v1877 = vld [vmem:[%s1789 + $0x15c] sm:$0xf]
        %v1878 = vld [vmem:[%s1789 + $0x160] sm:$0xf]
        %v1879 = vld [vmem:[%s1789 + $0x164] sm:$0xf]
        %v1880 = vld [vmem:[%s1789 + $0x168] sm:$0xf]
        %v1881 = vld [vmem:[%s1789 + $0x16c] sm:$0xf]
        %v1882 = vld [vmem:[%s1789 + $0x170] sm:$0xf]
        %v1883 = vld [vmem:[%s1789 + $0x174] sm:$0xf]
        %v1884 = vld [vmem:[%s1789 + $0x178] sm:$0xf]
        %v1885 = vld [vmem:[%s1789 + $0x17c] sm:$0xf]
        %v1886 = vld [vmem:[%s1789 + $0x180] sm:$0xf]
        %v1887 = vld [vmem:[%s1789 + $0x184] sm:$0xf]
        %v1888 = vld [vmem:[%s1789 + $0x188] sm:$0xf]
        %v1889 = vld [vmem:[%s1789 + $0x18c] sm:$0xf]
        %v1890 = vld [vmem:[%s1789 + $0x190] sm:$0xf]
        %v1891 = vld [vmem:[%s1789 + $0x194] sm:$0xf]
        %v1892 = vld [vmem:[%s1789 + $0x198] sm:$0xf]
        %v1893 = vld [vmem:[%s1789 + $0x19c] sm:$0xf]
        %v1894 = vld [vmem:[%s1789 + $0x1a0] sm:$0xf]
        %v1895 = vld [vmem:[%s1789 + $0x1a4] sm:$0xf]
        %v1896 = vld [vmem:[%s1789 + $0x1a8] sm:$0xf]
        %v1897 = vld [vmem:[%s1789 + $0x1ac] sm:$0xf]
        %v1898 = vld [vmem:[%s1789 + $0x1b0] sm:$0xf]
        %v1899 = vld [vmem:[%s1789 + $0x1b4] sm:$0xf]
        %v1900 = vld [vmem:[%s1789 + $0x1b8] sm:$0xf]
        %v1901 = vld [vmem:[%s1789 + $0x1bc] sm:$0xf]
        %v1902 = vld [vmem:[%s2 + $0x1] sm:$0x1]
        %v1903 = vlaneseq
        %v1904 = vshrl.u32 %v1903, 7
        %v1905 = vsub.s32 0, %v1904
        %v1906 = vrot.slane %v1902, %v1905
        %v2019 = vunpack.c.l.b16 %v1790
        %v2020 = vunpack.c.l.b16 %v1791
        %v2021 = vunpack.c.l.b16 %v1792
        %v2022 = vunpack.c.l.b16 %v1793
        %v2023 = vunpack.c.l.b16 %v1794
        %v2024 = vunpack.c.l.b16 %v1795
        %v2025 = vunpack.c.l.b16 %v1796
        %v2026 = vunpack.c.l.b16 %v1797
        %v2027 = vunpack.c.l.b16 %v1798
        %v2028 = vunpack.c.l.b16 %v1799
        %v2029 = vunpack.c.l.b16 %v1800
        %v2030 = vunpack.c.l.b16 %v1801
        %v2031 = vunpack.c.l.b16 %v1802
        %v2032 = vunpack.c.l.b16 %v1803
        %v2033 = vunpack.c.l.b16 %v1804
        %v2034 = vunpack.c.l.b16 %v1805
        %v2035 = vunpack.c.l.b16 %v1806
        %v2036 = vunpack.c.l.b16 %v1807
        %v2037 = vunpack.c.l.b16 %v1808
        %v2038 = vunpack.c.l.b16 %v1809
        %v2039 = vunpack.c.l.b16 %v1810
        %v2040 = vunpack.c.l.b16 %v1811
        %v2041 = vunpack.c.l.b16 %v1812
        %v2042 = vunpack.c.l.b16 %v1813
        %v2043 = vunpack.c.l.b16 %v1814
        %v2044 = vunpack.c.l.b16 %v1815
        %v2045 = vunpack.c.l.b16 %v1816
        %v2046 = vunpack.c.l.b16 %v1817
        %v2047 = vunpack.c.l.b16 %v1818
        %v2048 = vunpack.c.l.b16 %v1819
        %v2049 = vunpack.c.l.b16 %v1820
        %v2050 = vunpack.c.l.b16 %v1821
        %v2051 = vunpack.c.l.b16 %v1822
        %v2052 = vunpack.c.l.b16 %v1823
        %v2053 = vunpack.c.l.b16 %v1824
        %v2054 = vunpack.c.l.b16 %v1825
        %v2055 = vunpack.c.l.b16 %v1826
        %v2056 = vunpack.c.l.b16 %v1827
        %v2057 = vunpack.c.l.b16 %v1828
        %v2058 = vunpack.c.l.b16 %v1829
        %v2059 = vunpack.c.l.b16 %v1830
        %v2060 = vunpack.c.l.b16 %v1831
        %v2061 = vunpack.c.l.b16 %v1832
        %v2062 = vunpack.c.l.b16 %v1833
        %v2063 = vunpack.c.l.b16 %v1834
        %v2064 = vunpack.c.l.b16 %v1835
        %v2065 = vunpack.c.l.b16 %v1836
        %v2066 = vunpack.c.l.b16 %v1837
        %v2067 = vunpack.c.l.b16 %v1838
        %v2068 = vunpack.c.l.b16 %v1839
        %v2069 = vunpack.c.l.b16 %v1840
        %v2070 = vunpack.c.l.b16 %v1841
        %v2071 = vunpack.c.l.b16 %v1842
        %v2072 = vunpack.c.l.b16 %v1843
        %v2073 = vunpack.c.l.b16 %v1844
        %v2074 = vunpack.c.l.b16 %v1845
        %v2075 = vunpack.c.l.b16 %v1846
        %v2076 = vunpack.c.l.b16 %v1847
        %v2077 = vunpack.c.l.b16 %v1848
        %v2078 = vunpack.c.l.b16 %v1849
        %v2079 = vunpack.c.l.b16 %v1850
        %v2080 = vunpack.c.l.b16 %v1851
        %v2081 = vunpack.c.l.b16 %v1852
        %v2082 = vunpack.c.l.b16 %v1853
        %v2083 = vunpack.c.l.b16 %v1854
        %v2084 = vunpack.c.l.b16 %v1855
        %v2085 = vunpack.c.l.b16 %v1856
        %v2086 = vunpack.c.l.b16 %v1857
        %v2087 = vunpack.c.l.b16 %v1858
        %v2088 = vunpack.c.l.b16 %v1859
        %v2089 = vunpack.c.l.b16 %v1860
        %v2090 = vunpack.c.l.b16 %v1861
        %v2091 = vunpack.c.l.b16 %v1862
        %v2092 = vunpack.c.l.b16 %v1863
        %v2093 = vunpack.c.l.b16 %v1864
        %v2094 = vunpack.c.l.b16 %v1865
        %v2095 = vunpack.c.l.b16 %v1866
        %v2096 = vunpack.c.l.b16 %v1867
        %v2097 = vunpack.c.l.b16 %v1868
        %v2098 = vunpack.c.l.b16 %v1869
        %v2099 = vunpack.c.l.b16 %v1870
        %v2100 = vunpack.c.l.b16 %v1871
        %v2101 = vunpack.c.l.b16 %v1872
        %v2102 = vunpack.c.l.b16 %v1873
        %v2103 = vunpack.c.l.b16 %v1874
        %v2104 = vunpack.c.l.b16 %v1875
        %v2105 = vunpack.c.l.b16 %v1876
        %v2106 = vunpack.c.l.b16 %v1877
        %v2107 = vunpack.c.l.b16 %v1878
        %v2108 = vunpack.c.l.b16 %v1879
        %v2109 = vunpack.c.l.b16 %v1880
        %v2110 = vunpack.c.l.b16 %v1881
        %v2111 = vunpack.c.l.b16 %v1882
        %v2112 = vunpack.c.l.b16 %v1883
        %v2113 = vunpack.c.l.b16 %v1884
        %v2114 = vunpack.c.l.b16 %v1885
        %v2115 = vunpack.c.l.b16 %v1886
        %v2116 = vunpack.c.l.b16 %v1887
        %v2117 = vunpack.c.l.b16 %v1888
        %v2118 = vunpack.c.l.b16 %v1889
        %v2119 = vunpack.c.l.b16 %v1890
        %v2120 = vunpack.c.l.b16 %v1891
        %v2121 = vunpack.c.l.b16 %v1892
        %v2122 = vunpack.c.l.b16 %v1893
        %v2123 = vunpack.c.l.b16 %v1894
        %v2124 = vunpack.c.l.b16 %v1895
        %v2125 = vunpack.c.l.b16 %v1896
        %v2126 = vunpack.c.l.b16 %v1897
        %v2127 = vunpack.c.l.b16 %v1898
        %v2128 = vunpack.c.l.b16 %v1899
        %v2129 = vunpack.c.l.b16 %v1900
        %v2130 = vunpack.c.l.b16 %v1901
        %v2131 = vpack.c.b16 %v2020, %v2019
        %v2132 = vpack.c.b16 %v2022, %v2021
        %v2133 = vpack.c.b16 %v2024, %v2023
        %v2134 = vpack.c.b16 %v2026, %v2025
        %v2135 = vpack.c.b16 %v2028, %v2027
        %v2136 = vpack.c.b16 %v2030, %v2029
        %v2137 = vpack.c.b16 %v2032, %v2031
        %v2138 = vpack.c.b16 %v2034, %v2033
        %v2139 = vpack.c.b16 %v2036, %v2035
        %v2140 = vpack.c.b16 %v2038, %v2037
        %v2141 = vpack.c.b16 %v2040, %v2039
        %v2142 = vpack.c.b16 %v2042, %v2041
        %v2143 = vpack.c.b16 %v2044, %v2043
        %v2144 = vpack.c.b16 %v2046, %v2045
        %v2145 = vpack.c.b16 %v2048, %v2047
        %v2146 = vpack.c.b16 %v2050, %v2049
        %v2147 = vpack.c.b16 %v2052, %v2051
        %v2148 = vpack.c.b16 %v2054, %v2053
        %v2149 = vpack.c.b16 %v2056, %v2055
        %v2150 = vpack.c.b16 %v2058, %v2057
        %v2151 = vpack.c.b16 %v2060, %v2059
        %v2152 = vpack.c.b16 %v2062, %v2061
        %v2153 = vpack.c.b16 %v2064, %v2063
        %v2154 = vpack.c.b16 %v2066, %v2065
        %v2155 = vpack.c.b16 %v2068, %v2067
        %v2156 = vpack.c.b16 %v2070, %v2069
        %v2157 = vpack.c.b16 %v2072, %v2071
        %v2158 = vpack.c.b16 %v2074, %v2073
        %v2159 = vpack.c.b16 %v2076, %v2075
        %v2160 = vpack.c.b16 %v2078, %v2077
        %v2161 = vpack.c.b16 %v2080, %v2079
        %v2162 = vpack.c.b16 %v2082, %v2081
        %v2163 = vpack.c.b16 %v2084, %v2083
        %v2164 = vpack.c.b16 %v2086, %v2085
        %v2165 = vpack.c.b16 %v2088, %v2087
        %v2166 = vpack.c.b16 %v2090, %v2089
        %v2167 = vpack.c.b16 %v2092, %v2091
        %v2168 = vpack.c.b16 %v2094, %v2093
        %v2169 = vpack.c.b16 %v2096, %v2095
        %v2170 = vpack.c.b16 %v2098, %v2097
        %v2171 = vpack.c.b16 %v2100, %v2099
        %v2172 = vpack.c.b16 %v2102, %v2101
        %v2173 = vpack.c.b16 %v2104, %v2103
        %v2174 = vpack.c.b16 %v2106, %v2105
        %v2175 = vpack.c.b16 %v2108, %v2107
        %v2176 = vpack.c.b16 %v2110, %v2109
        %v2177 = vpack.c.b16 %v2112, %v2111
        %v2178 = vpack.c.b16 %v2114, %v2113
        %v2179 = vpack.c.b16 %v2116, %v2115
        %v2180 = vpack.c.b16 %v2118, %v2117
        %v2181 = vpack.c.b16 %v2120, %v2119
        %v2182 = vpack.c.b16 %v2122, %v2121
        %v2183 = vpack.c.b16 %v2124, %v2123
        %v2184 = vpack.c.b16 %v2126, %v2125
        %v2185 = vpack.c.b16 %v2128, %v2127
        %v2186 = vpack.c.b16 %v2130, %v2129
        %2243 = vmatprep.subr.bf16.mxu0 0
        %2244 = vmatpush1.bf16.msra.mxu0 %v2138
        %2245 = vmatprep.subr.bf16.mxu0 0
        %2246 = vmatpush1.bf16.msra.mxu0 %v2137
        %2247 = vmatprep.subr.bf16.mxu0 0
        %2248 = vmatpush1.bf16.msra.mxu0 %v2136
        %2249 = vmatprep.subr.bf16.mxu0 0
        %2250 = vmatpush1.bf16.msra.mxu0 %v2135
        %2251 = vmatprep.subr.bf16.mxu0 0
        %2252 = vmatpush1.bf16.msra.mxu0 %v2134
        %2253 = vmatprep.subr.bf16.mxu0 0
        %2254 = vmatpush1.bf16.msra.mxu0 %v2133
        %2255 = vmatprep.subr.bf16.mxu0 0
        %2256 = vmatpush1.bf16.msra.mxu0 %v2132
        %2257 = vmatprep.subr.bf16.mxu0 0
        %2258 = vmatpush1.bf16.msra.mxu0 %v2131
        %2259 = vmatprep.subr.bf16.mxu0 0
        %2260 = vmatpush2.bf16.msra.mxu0 %v2146
        %2261 = vmatprep.subr.bf16.mxu0 0
        %2262 = vmatpush2.bf16.msra.mxu0 %v2145
        %2263 = vmatprep.subr.bf16.mxu0 0
        %2264 = vmatpush2.bf16.msra.mxu0 %v2144
        %2265 = vmatprep.subr.bf16.mxu0 0
        %2266 = vmatpush2.bf16.msra.mxu0 %v2143
        %2267 = vmatprep.subr.bf16.mxu0 0
        %2268 = vmatpush2.bf16.msra.mxu0 %v2142
        %2269 = vmatprep.subr.bf16.mxu0 0
        %2270 = vmatpush2.bf16.msra.mxu0 %v2141
        %2271 = vmatprep.subr.bf16.mxu0 0
        %2272 = vmatpush2.bf16.msra.mxu0 %v2140
        %2273 = vmatprep.subr.bf16.mxu0 0
        %2274 = vmatpush2.bf16.msra.mxu0 %v2139
        %2275 = vmatprep.mubr.bf16.mxu0 %v1626
        %2276 = vmatmul.mubr.bf16.gmra.mxu0 %v1623
        %v2277 = vpop.f32.mrf.mxu0
        %v2278 = vadd.f32 %v1906, %v2277
        %v2279 = vpop.f32.mrf.mxu0
        %v2280 = vpop.f32.mrf.mxu0
        %v2281 = vadd.f32 %v1906, %v2280
        %v2282 = vpop.f32.mrf.mxu0
        %2283 = vmatprep.mubr.bf16.mxu0 %v1643
        %2284 = vmatmul.mubr.bf16.gmra.mxu0 %v1593
        %v2285 = vpop.f32.mrf.mxu0
        %v2286 = vadd.f32 %v1906, %v2285
        %v2287 = vpop.f32.mrf.mxu0
        %v2288 = vpop.f32.mrf.mxu0
        %v2289 = vadd.f32 %v1906, %v2288
        %v2290 = vpop.f32.mrf.mxu0
        %2291 = vmatprep.mubr.bf16.mxu0 %v1655
        %2292 = vmatmul.mubr.bf16.gmra.mxu0 %v1595
        %v2293 = vpop.f32.mrf.mxu0
        %v2294 = vadd.f32 %v1906, %v2293
        %v2295 = vpop.f32.mrf.mxu0
        %v2296 = vpop.f32.mrf.mxu0
        %v2297 = vadd.f32 %v1906, %v2296
        %v2298 = vpop.f32.mrf.mxu0
        %2299 = vmatprep.mubr.bf16.mxu0 %v1667
        %2300 = vmatmul.mubr.bf16.gmra.mxu0 %v1597
        %v2301 = vpop.f32.mrf.mxu0
        %v2302 = vadd.f32 %v1906, %v2301
        %v2303 = vpop.f32.mrf.mxu0
        %v2304 = vpop.f32.mrf.mxu0
        %v2305 = vadd.f32 %v1906, %v2304
        %v2306 = vpop.f32.mrf.mxu0
        %2307 = vmatprep.mubr.bf16.mxu0 %v1681
        %2308 = vmatmul.mubr.bf16.gmra.mxu0 %v1678
        %v2309 = vpop.f32.mrf.mxu0
        %v2310 = vadd.f32 %v1906, %v2309
        %v2311 = vpop.f32.mrf.mxu0
        %v2312 = vpop.f32.mrf.mxu0
        %v2313 = vadd.f32 %v1906, %v2312
        %v2314 = vpop.f32.mrf.mxu0
        %2315 = vmatprep.mubr.bf16.mxu0 %v1698
        %2316 = vmatmul.mubr.bf16.gmra.mxu0 %v1601
        %v2317 = vpop.f32.mrf.mxu0
        %v2318 = vadd.f32 %v1906, %v2317
        %v2319 = vpop.f32.mrf.mxu0
        %v2320 = vpop.f32.mrf.mxu0
        %v2321 = vadd.f32 %v1906, %v2320
        %v2322 = vpop.f32.mrf.mxu0
        %2323 = vmatprep.mubr.bf16.mxu0 %v1710
        %2324 = vmatmul.mubr.bf16.gmra.mxu0 %v1603
        %v2325 = vpop.f32.mrf.mxu0
        %v2326 = vadd.f32 %v1906, %v2325
        %v2327 = vpop.f32.mrf.mxu0
        %v2328 = vpop.f32.mrf.mxu0
        %v2329 = vadd.f32 %v1906, %v2328
        %v2330 = vpop.f32.mrf.mxu0
        %2331 = vmatprep.mubr.bf16.mxu0 %v1722
        %2332 = vmatmul.mubr.bf16.gmra.mxu0 %v1605
        %v2333 = vpop.f32.mrf.mxu0
        %v2334 = vadd.f32 %v1906, %v2333
        %v2335 = vpop.f32.mrf.mxu0
        %v2336 = vpop.f32.mrf.mxu0
        %v2337 = vadd.f32 %v1906, %v2336
        %v2338 = vpop.f32.mrf.mxu0
        %2339 = vdwg.mxu0
        %2340 = vmatprep.subr.bf16.mxu0 0
        %2341 = vmatpush1.bf16.msra.mxu0 %v2154
        %2342 = vmatprep.subr.bf16.mxu0 0
        %2343 = vmatpush1.bf16.msra.mxu0 %v2153
        %2344 = vmatprep.subr.bf16.mxu0 0
        %2345 = vmatpush1.bf16.msra.mxu0 %v2152
        %2346 = vmatprep.subr.bf16.mxu0 0
        %2347 = vmatpush1.bf16.msra.mxu0 %v2151
        %2348 = vmatprep.subr.bf16.mxu0 0
        %2349 = vmatpush1.bf16.msra.mxu0 %v2150
        %2350 = vmatprep.subr.bf16.mxu0 0
        %2351 = vmatpush1.bf16.msra.mxu0 %v2149
        %2352 = vmatprep.subr.bf16.mxu0 0
        %2353 = vmatpush1.bf16.msra.mxu0 %v2148
        %2354 = vmatprep.subr.bf16.mxu0 0
        %2355 = vmatpush1.bf16.msra.mxu0 %v2147
        %2356 = vmatprep.subr.bf16.mxu0 0
        %2357 = vmatpush2.bf16.msra.mxu0 %v2162
        %2358 = vmatprep.subr.bf16.mxu0 0
        %2359 = vmatpush2.bf16.msra.mxu0 %v2161
        %2360 = vmatprep.subr.bf16.mxu0 0
        %2361 = vmatpush2.bf16.msra.mxu0 %v2160
        %2362 = vmatprep.subr.bf16.mxu0 0
        %2363 = vmatpush2.bf16.msra.mxu0 %v2159
        %2364 = vmatprep.subr.bf16.mxu0 0
        %2365 = vmatpush2.bf16.msra.mxu0 %v2158
        %2366 = vmatprep.subr.bf16.mxu0 0
        %2367 = vmatpush2.bf16.msra.mxu0 %v2157
        %2368 = vmatprep.subr.bf16.mxu0 0
        %2369 = vmatpush2.bf16.msra.mxu0 %v2156
        %2370 = vmatprep.subr.bf16.mxu0 0
        %2371 = vmatpush2.bf16.msra.mxu0 %v2155
        %2372 = vmatprep.mubr.bf16.mxu0 %v1632
        %2373 = vmatmul.mubr.bf16.gmra.mxu0 %v1629
        %v2374 = vpop.f32.mrf.mxu0
        %v2375 = vadd.f32 %v2278, %v2374
        %v2376 = vpop.f32.mrf.mxu0
        %v2377 = vpop.f32.mrf.mxu0
        %v2378 = vadd.f32 %v2281, %v2377
        %v2379 = vpop.f32.mrf.mxu0
        %2380 = vmatprep.mubr.bf16.mxu0 %v1647
        %2381 = vmatmul.mubr.bf16.gmra.mxu0 %v1645
        %v2382 = vpop.f32.mrf.mxu0
        %v2383 = vadd.f32 %v2286, %v2382
        %v2384 = vpop.f32.mrf.mxu0
        %v2385 = vpop.f32.mrf.mxu0
        %v2386 = vadd.f32 %v2289, %v2385
        %v2387 = vpop.f32.mrf.mxu0
        %2388 = vmatprep.mubr.bf16.mxu0 %v1659
        %2389 = vmatmul.mubr.bf16.gmra.mxu0 %v1657
        %v2390 = vpop.f32.mrf.mxu0
        %v2391 = vadd.f32 %v2294, %v2390
        %v2392 = vpop.f32.mrf.mxu0
        %v2393 = vpop.f32.mrf.mxu0
        %v2394 = vadd.f32 %v2297, %v2393
        %v2395 = vpop.f32.mrf.mxu0
        %2396 = vmatprep.mubr.bf16.mxu0 %v1671
        %2397 = vmatmul.mubr.bf16.gmra.mxu0 %v1669
        %v2398 = vpop.f32.mrf.mxu0
        %v2399 = vadd.f32 %v2302, %v2398
        %v2400 = vpop.f32.mrf.mxu0
        %v2401 = vpop.f32.mrf.mxu0
        %v2402 = vadd.f32 %v2305, %v2401
        %v2403 = vpop.f32.mrf.mxu0
        %2404 = vmatprep.mubr.bf16.mxu0 %v1687
        %2405 = vmatmul.mubr.bf16.gmra.mxu0 %v1684
        %v2406 = vpop.f32.mrf.mxu0
        %v2407 = vadd.f32 %v2310, %v2406
        %v2408 = vpop.f32.mrf.mxu0
        %v2409 = vpop.f32.mrf.mxu0
        %v2410 = vadd.f32 %v2313, %v2409
        %v2411 = vpop.f32.mrf.mxu0
        %2412 = vmatprep.mubr.bf16.mxu0 %v1702
        %2413 = vmatmul.mubr.bf16.gmra.mxu0 %v1700
        %v2414 = vpop.f32.mrf.mxu0
        %v2415 = vadd.f32 %v2318, %v2414
        %v2416 = vpop.f32.mrf.mxu0
        %v2417 = vpop.f32.mrf.mxu0
        %v2418 = vadd.f32 %v2321, %v2417
        %v2419 = vpop.f32.mrf.mxu0
        %2420 = vmatprep.mubr.bf16.mxu0 %v1714
        %2421 = vmatmul.mubr.bf16.gmra.mxu0 %v1712
        %v2422 = vpop.f32.mrf.mxu0
        %v2423 = vadd.f32 %v2326, %v2422
        %v2424 = vpop.f32.mrf.mxu0
        %v2425 = vpop.f32.mrf.mxu0
        %v2426 = vadd.f32 %v2329, %v2425
        %v2427 = vpop.f32.mrf.mxu0
        %2428 = vmatprep.mubr.bf16.mxu0 %v1726
        %2429 = vmatmul.mubr.bf16.gmra.mxu0 %v1724
        %v2430 = vpop.f32.mrf.mxu0
        %v2431 = vadd.f32 %v2334, %v2430
        %v2432 = vpop.f32.mrf.mxu0
        %v2433 = vpop.f32.mrf.mxu0
        %v2434 = vadd.f32 %v2337, %v2433
        %v2435 = vpop.f32.mrf.mxu0
        %2436 = vdwg.mxu0
        %2437 = vmatprep.subr.bf16.mxu0 0
        %2438 = vmatpush1.bf16.msra.mxu0 %v2170
        %2439 = vmatprep.subr.bf16.mxu0 0
        %2440 = vmatpush1.bf16.msra.mxu0 %v2169
        %2441 = vmatprep.subr.bf16.mxu0 0
        %2442 = vmatpush1.bf16.msra.mxu0 %v2168
        %2443 = vmatprep.subr.bf16.mxu0 0
        %2444 = vmatpush1.bf16.msra.mxu0 %v2167
        %2445 = vmatprep.subr.bf16.mxu0 0
        %2446 = vmatpush1.bf16.msra.mxu0 %v2166
        %2447 = vmatprep.subr.bf16.mxu0 0
        %2448 = vmatpush1.bf16.msra.mxu0 %v2165
        %2449 = vmatprep.subr.bf16.mxu0 0
        %2450 = vmatpush1.bf16.msra.mxu0 %v2164
        %2451 = vmatprep.subr.bf16.mxu0 0
        %2452 = vmatpush1.bf16.msra.mxu0 %v2163
        %2453 = vmatprep.subr.bf16.mxu0 0
        %2454 = vmatpush2.bf16.msra.mxu0 %v2178
        %2455 = vmatprep.subr.bf16.mxu0 0
        %2456 = vmatpush2.bf16.msra.mxu0 %v2177
        %2457 = vmatprep.subr.bf16.mxu0 0
        %2458 = vmatpush2.bf16.msra.mxu0 %v2176
        %2459 = vmatprep.subr.bf16.mxu0 0
        %2460 = vmatpush2.bf16.msra.mxu0 %v2175
        %2461 = vmatprep.subr.bf16.mxu0 0
        %2462 = vmatpush2.bf16.msra.mxu0 %v2174
        %2463 = vmatprep.subr.bf16.mxu0 0
        %2464 = vmatpush2.bf16.msra.mxu0 %v2173
        %2465 = vmatprep.subr.bf16.mxu0 0
        %2466 = vmatpush2.bf16.msra.mxu0 %v2172
        %2467 = vmatprep.subr.bf16.mxu0 0
        %2468 = vmatpush2.bf16.msra.mxu0 %v2171
        %2469 = vmatprep.mubr.bf16.mxu0 %v1638
        %2470 = vmatmul.mubr.bf16.gmra.mxu0 %v1635
        %v2471 = vpop.f32.mrf.mxu0
        %v2472 = vadd.f32 %v2375, %v2471
        %v2473 = vpop.f32.mrf.mxu0
        %v2474 = vpop.f32.mrf.mxu0
        %v2475 = vadd.f32 %v2378, %v2474
        %v2476 = vpop.f32.mrf.mxu0
        %2477 = vmatprep.mubr.bf16.mxu0 %v1651
        %2478 = vmatmul.mubr.bf16.gmra.mxu0 %v1649
        %v2479 = vpop.f32.mrf.mxu0
        %v2480 = vadd.f32 %v2383, %v2479
        %v2481 = vpop.f32.mrf.mxu0
        %v2482 = vpop.f32.mrf.mxu0
        %v2483 = vadd.f32 %v2386, %v2482
        %v2484 = vpop.f32.mrf.mxu0
        %2485 = vmatprep.mubr.bf16.mxu0 %v1663
        %2486 = vmatmul.mubr.bf16.gmra.mxu0 %v1661
        %v2487 = vpop.f32.mrf.mxu0
        %v2488 = vadd.f32 %v2391, %v2487
        %v2489 = vpop.f32.mrf.mxu0
        %v2490 = vpop.f32.mrf.mxu0
        %v2491 = vadd.f32 %v2394, %v2490
        %v2492 = vpop.f32.mrf.mxu0
        %2493 = vmatprep.mubr.bf16.mxu0 %v1675
        %2494 = vmatmul.mubr.bf16.gmra.mxu0 %v1673
        %v2495 = vpop.f32.mrf.mxu0
        %v2496 = vadd.f32 %v2399, %v2495
        %v2497 = vpop.f32.mrf.mxu0
        %v2498 = vpop.f32.mrf.mxu0
        %v2499 = vadd.f32 %v2402, %v2498
        %v2500 = vpop.f32.mrf.mxu0
        %2501 = vmatprep.mubr.bf16.mxu0 %v1693
        %2502 = vmatmul.mubr.bf16.gmra.mxu0 %v1690
        %v2503 = vpop.f32.mrf.mxu0
        %v2504 = vadd.f32 %v2407, %v2503
        %v2505 = vpop.f32.mrf.mxu0
        %v2506 = vpop.f32.mrf.mxu0
        %v2507 = vadd.f32 %v2410, %v2506
        %v2508 = vpop.f32.mrf.mxu0
        %2509 = vmatprep.mubr.bf16.mxu0 %v1706
        %2510 = vmatmul.mubr.bf16.gmra.mxu0 %v1704
        %v2511 = vpop.f32.mrf.mxu0
        %v2512 = vadd.f32 %v2415, %v2511
        %v2513 = vpop.f32.mrf.mxu0
        %v2514 = vpop.f32.mrf.mxu0
        %v2515 = vadd.f32 %v2418, %v2514
        %v2516 = vpop.f32.mrf.mxu0
        %2517 = vmatprep.mubr.bf16.mxu0 %v1718
        %2518 = vmatmul.mubr.bf16.gmra.mxu0 %v1716
        %v2519 = vpop.f32.mrf.mxu0
        %v2520 = vadd.f32 %v2423, %v2519
        %v2521 = vpop.f32.mrf.mxu0
        %v2522 = vpop.f32.mrf.mxu0
        %v2523 = vadd.f32 %v2426, %v2522
        %v2524 = vpop.f32.mrf.mxu0
        %2525 = vmatprep.mubr.bf16.mxu0 %v1730
        %2526 = vmatmul.mubr.bf16.gmra.mxu0 %v1728
        %v2527 = vpop.f32.mrf.mxu0
        %v2528 = vadd.f32 %v2431, %v2527
        %v2529 = vpop.f32.mrf.mxu0
        %v2530 = vpop.f32.mrf.mxu0
        %v2531 = vadd.f32 %v2434, %v2530
        %v2532 = vpop.f32.mrf.mxu0
        %2533 = vdwg.mxu0
        %2534 = vmatprep.subr.bf16.mxu0 0
        %2535 = vmatpush1.bf16.msra.mxu0 %v2186
        %2536 = vmatprep.subr.bf16.mxu0 0
        %2537 = vmatpush1.bf16.msra.mxu0 %v2185
        %2538 = vmatprep.subr.bf16.mxu0 0
        %2539 = vmatpush1.bf16.msra.mxu0 %v2184
        %2540 = vmatprep.subr.bf16.mxu0 0
        %2541 = vmatpush1.bf16.msra.mxu0 %v2183
        %2542 = vmatprep.subr.bf16.mxu0 0
        %2543 = vmatpush1.bf16.msra.mxu0 %v2182
        %2544 = vmatprep.subr.bf16.mxu0 0
        %2545 = vmatpush1.bf16.msra.mxu0 %v2181
        %2546 = vmatprep.subr.bf16.mxu0 0
        %2547 = vmatpush1.bf16.msra.mxu0 %v2180
        %2548 = vmatprep.subr.bf16.mxu0 0
        %2549 = vmatpush1.bf16.msra.mxu0 %v2179
        %2550 = vmatprep.subr.bf16.mxu0 0
        %2551 = vmatpush2.bf16.msra.mxu0 0
        %2552 = vmatprep.subr.bf16.mxu0 0
        %2553 = vmatpush2.bf16.msra.mxu0 0
        %2554 = vmatprep.subr.bf16.mxu0 0
        %2555 = vmatpush2.bf16.msra.mxu0 0
        %2556 = vmatprep.subr.bf16.mxu0 0
        %2557 = vmatpush2.bf16.msra.mxu0 0
        %2558 = vmatprep.subr.bf16.mxu0 0
        %2559 = vmatpush2.bf16.msra.mxu0 0
        %2560 = vmatprep.subr.bf16.mxu0 0
        %2561 = vmatpush2.bf16.msra.mxu0 0
        %2562 = vmatprep.subr.bf16.mxu0 0
        %2563 = vmatpush2.bf16.msra.mxu0 0
        %2564 = vmatprep.subr.bf16.mxu0 0
        %2565 = vmatpush2.bf16.msra.mxu0 0
        %2566 = vmatprep.mubr.bf16.mxu0 0
        %2567 = vmatmul.mubr.bf16.gmra.mxu0 %v1641
        %v2568 = vpop.f32.mrf.mxu0
        %v2569 = vadd.f32 %v2472, %v2568
        %v2570 = vpop.f32.mrf.mxu0
        %v2571 = vpop.f32.mrf.mxu0
        %v2572 = vadd.f32 %v2475, %v2571
        %v2573 = vpop.f32.mrf.mxu0
        %2574 = vmatprep.mubr.bf16.mxu0 0
        %2575 = vmatmul.mubr.bf16.gmra.mxu0 %v1653
        %v2576 = vpop.f32.mrf.mxu0
        %v2577 = vadd.f32 %v2480, %v2576
        %v2578 = vpop.f32.mrf.mxu0
        %v2579 = vpop.f32.mrf.mxu0
        %v2580 = vadd.f32 %v2483, %v2579
        %v2581 = vpop.f32.mrf.mxu0
        %2582 = vmatprep.mubr.bf16.mxu0 0
        %2583 = vmatmul.mubr.bf16.gmra.mxu0 %v1665
        %v2584 = vpop.f32.mrf.mxu0
        %v2585 = vadd.f32 %v2488, %v2584
        %v2586 = vpop.f32.mrf.mxu0
        %v2587 = vpop.f32.mrf.mxu0
        %v2588 = vadd.f32 %v2491, %v2587
        %v2589 = vpop.f32.mrf.mxu0
        %2590 = vmatprep.mubr.bf16.mxu0 0
        %2591 = vmatmul.mubr.bf16.gmra.mxu0 %v1677
        %v2592 = vpop.f32.mrf.mxu0
        %v2593 = vadd.f32 %v2496, %v2592
        %v2594 = vpop.f32.mrf.mxu0
        %v2595 = vpop.f32.mrf.mxu0
        %v2596 = vadd.f32 %v2499, %v2595
        %v2597 = vpop.f32.mrf.mxu0
        %2598 = vmatprep.mubr.bf16.mxu0 0
        %2599 = vmatmul.mubr.bf16.gmra.mxu0 %v1696
        %v2600 = vpop.f32.mrf.mxu0
        %v2601 = vadd.f32 %v2504, %v2600
        %v2602 = vpop.f32.mrf.mxu0
        %v2603 = vpop.f32.mrf.mxu0
        %v2604 = vadd.f32 %v2507, %v2603
        %v2605 = vpop.f32.mrf.mxu0
        %2606 = vmatprep.mubr.bf16.mxu0 0
        %2607 = vmatmul.mubr.bf16.gmra.mxu0 %v1708
        %v2608 = vpop.f32.mrf.mxu0
        %v2609 = vadd.f32 %v2512, %v2608
        %v2610 = vpop.f32.mrf.mxu0
        %v2611 = vpop.f32.mrf.mxu0
        %v2612 = vadd.f32 %v2515, %v2611
        %v2613 = vpop.f32.mrf.mxu0
        %2614 = vmatprep.mubr.bf16.mxu0 0
        %2615 = vmatmul.mubr.bf16.gmra.mxu0 %v1720
        %v2616 = vpop.f32.mrf.mxu0
        %v2617 = vadd.f32 %v2520, %v2616
        %v2618 = vpop.f32.mrf.mxu0
        %v2619 = vpop.f32.mrf.mxu0
        %v2620 = vadd.f32 %v2523, %v2619
        %v2621 = vpop.f32.mrf.mxu0
        %2622 = vmatprep.mubr.bf16.mxu0 0
        %2623 = vmatmul.mubr.bf16.gmra.mxu0 %v1732
        %v2624 = vpop.f32.mrf.mxu0
        %v2625 = vadd.f32 %v2528, %v2624
        %v2626 = vpop.f32.mrf.mxu0
        %v2627 = vpop.f32.mrf.mxu0
        %v2628 = vadd.f32 %v2531, %v2627
        %v2629 = vpop.f32.mrf.mxu0
        %2630 = vdwg.mxu0
        %v2631 = vmul.f32 %v2569, %v2569
        %v2632 = vmul.f32 %v2572, %v2572
        %v2633 = vmul.f32 %v2577, %v2577
        %v2634 = vmul.f32 %v2580, %v2580
        %v2635 = vmul.f32 %v2585, %v2585
        %v2636 = vmul.f32 %v2588, %v2588
        %v2637 = vmul.f32 %v2593, %v2593
        %v2638 = vmul.f32 %v2596, %v2596
        %v2639 = vmul.f32 %v2601, %v2601
        %v2640 = vmul.f32 %v2604, %v2604
        %v2641 = vmul.f32 %v2609, %v2609
        %v2642 = vmul.f32 %v2612, %v2612
        %v2643 = vmul.f32 %v2617, %v2617
        %v2644 = vmul.f32 %v2620, %v2620
        %v2645 = vmul.f32 %v2625, %v2625
        %v2646 = vmul.f32 %v2628, %v2628
        %v2647 = vmul.f32 %v2569, %v2631
        %v2648 = vmul.f32 %v2572, %v2632
        %v2649 = vmul.f32 %v2577, %v2633
        %v2650 = vmul.f32 %v2580, %v2634
        %v2651 = vmul.f32 %v2585, %v2635
        %v2652 = vmul.f32 %v2588, %v2636
        %v2653 = vmul.f32 %v2593, %v2637
        %v2654 = vmul.f32 %v2596, %v2638
        %v2655 = vmul.f32 %v2601, %v2639
        %v2656 = vmul.f32 %v2604, %v2640
        %v2657 = vmul.f32 %v2609, %v2641
        %v2658 = vmul.f32 %v2612, %v2642
        %v2659 = vmul.f32 %v2617, %v2643
        %v2660 = vmul.f32 %v2620, %v2644
        %v2661 = vmul.f32 %v2625, %v2645
        %v2662 = vmul.f32 %v2628, %v2646
        %v2663 = vmul.f32 %v2647, 0.044715
        %v2664 = vmul.f32 %v2648, 0.044715
        %v2665 = vmul.f32 %v2649, 0.044715
        %v2666 = vmul.f32 %v2650, 0.044715
        %v2667 = vmul.f32 %v2651, 0.044715
        %v2668 = vmul.f32 %v2652, 0.044715
        %v2669 = vmul.f32 %v2653, 0.044715
        %v2670 = vmul.f32 %v2654, 0.044715
        %v2671 = vmul.f32 %v2655, 0.044715
        %v2672 = vmul.f32 %v2656, 0.044715
        %v2673 = vmul.f32 %v2657, 0.044715
        %v2674 = vmul.f32 %v2658, 0.044715
        %v2675 = vmul.f32 %v2659, 0.044715
        %v2676 = vmul.f32 %v2660, 0.044715
        %v2677 = vmul.f32 %v2661, 0.044715
        %v2678 = vmul.f32 %v2662, 0.044715
        %v2679 = vadd.f32 %v2569, %v2663
        %v2680 = vadd.f32 %v2572, %v2664
        %v2681 = vadd.f32 %v2577, %v2665
        %v2682 = vadd.f32 %v2580, %v2666
        %v2683 = vadd.f32 %v2585, %v2667
        %v2684 = vadd.f32 %v2588, %v2668
        %v2685 = vadd.f32 %v2593, %v2669
        %v2686 = vadd.f32 %v2596, %v2670
        %v2687 = vadd.f32 %v2601, %v2671
        %v2688 = vadd.f32 %v2604, %v2672
        %v2689 = vadd.f32 %v2609, %v2673
        %v2690 = vadd.f32 %v2612, %v2674
        %v2691 = vadd.f32 %v2617, %v2675
        %v2692 = vadd.f32 %v2620, %v2676
        %v2693 = vadd.f32 %v2625, %v2677
        %v2694 = vadd.f32 %v2628, %v2678
        %v2695 = vmul.f32 %v2679, 0.7978846
        %v2696 = vmul.f32 %v2680, 0.7978846
        %v2697 = vmul.f32 %v2681, 0.7978846
        %v2698 = vmul.f32 %v2682, 0.7978846
        %v2699 = vmul.f32 %v2683, 0.7978846
        %v2700 = vmul.f32 %v2684, 0.7978846
        %v2701 = vmul.f32 %v2685, 0.7978846
        %v2702 = vmul.f32 %v2686, 0.7978846
        %v2703 = vmul.f32 %v2687, 0.7978846
        %v2704 = vmul.f32 %v2688, 0.7978846
        %v2705 = vmul.f32 %v2689, 0.7978846
        %v2706 = vmul.f32 %v2690, 0.7978846
        %v2707 = vmul.f32 %v2691, 0.7978846
        %v2708 = vmul.f32 %v2692, 0.7978846
        %v2709 = vmul.f32 %v2693, 0.7978846
        %v2710 = vmul.f32 %v2694, 0.7978846
        %v2711 = vtanh.pop %v2695
        %v2712 = vtanh.pop %v2696
        %v2713 = vtanh.pop %v2697
        %v2714 = vtanh.pop %v2698
        %v2715 = vtanh.pop %v2699
        %v2716 = vtanh.pop %v2700
        %v2717 = vtanh.pop %v2701
        %v2718 = vtanh.pop %v2702
        %v2719 = vtanh.pop %v2703
        %v2720 = vtanh.pop %v2704
        %v2721 = vtanh.pop %v2705
        %v2722 = vtanh.pop %v2706
        %v2723 = vtanh.pop %v2707
        %v2724 = vtanh.pop %v2708
        %v2725 = vtanh.pop %v2709
        %v2726 = vtanh.pop %v2710
        %v2727 = vadd.f32 %v2711, 1.0
        %v2728 = vadd.f32 %v2712, 1.0
        %v2729 = vadd.f32 %v2713, 1.0
        %v2730 = vadd.f32 %v2714, 1.0
        %v2731 = vadd.f32 %v2715, 1.0
        %v2732 = vadd.f32 %v2716, 1.0
        %v2733 = vadd.f32 %v2717, 1.0
        %v2734 = vadd.f32 %v2718, 1.0
        %v2735 = vadd.f32 %v2719, 1.0
        %v2736 = vadd.f32 %v2720, 1.0
        %v2737 = vadd.f32 %v2721, 1.0
        %v2738 = vadd.f32 %v2722, 1.0
        %v2739 = vadd.f32 %v2723, 1.0
        %v2740 = vadd.f32 %v2724, 1.0
        %v2741 = vadd.f32 %v2725, 1.0
        %v2742 = vadd.f32 %v2726, 1.0
        %v2743 = vmul.f32 %v2727, 0.5
        %v2744 = vmul.f32 %v2728, 0.5
        %v2745 = vmul.f32 %v2729, 0.5
        %v2746 = vmul.f32 %v2730, 0.5
        %v2747 = vmul.f32 %v2731, 0.5
        %v2748 = vmul.f32 %v2732, 0.5
        %v2749 = vmul.f32 %v2733, 0.5
        %v2750 = vmul.f32 %v2734, 0.5
        %v2751 = vmul.f32 %v2735, 0.5
        %v2752 = vmul.f32 %v2736, 0.5
        %v2753 = vmul.f32 %v2737, 0.5
        %v2754 = vmul.f32 %v2738, 0.5
        %v2755 = vmul.f32 %v2739, 0.5
        %v2756 = vmul.f32 %v2740, 0.5
        %v2757 = vmul.f32 %v2741, 0.5
        %v2758 = vmul.f32 %v2742, 0.5
        %v2759 = vmul.f32 %v2569, %v2743
        %v2760 = vmul.f32 %v2572, %v2744
        %v2761 = vmul.f32 %v2577, %v2745
        %v2762 = vmul.f32 %v2580, %v2746
        %v2763 = vmul.f32 %v2585, %v2747
        %v2764 = vmul.f32 %v2588, %v2748
        %v2765 = vmul.f32 %v2593, %v2749
        %v2766 = vmul.f32 %v2596, %v2750
        %v2767 = vmul.f32 %v2601, %v2751
        %v2768 = vmul.f32 %v2604, %v2752
        %v2769 = vmul.f32 %v2609, %v2753
        %v2770 = vmul.f32 %v2612, %v2754
        %v2771 = vmul.f32 %v2617, %v2755
        %v2772 = vmul.f32 %v2620, %v2756
        %v2773 = vmul.f32 %v2625, %v2757
        %v2774 = vmul.f32 %v2628, %v2758
        %v2775 = vadd.f32 %v1497, %v2759
        %v2776 = vadd.f32 %v1498, %v2760
        %v2777 = vadd.f32 %v1499, %v2761
        %v2778 = vadd.f32 %v1500, %v2762
        %v2779 = vadd.f32 %v1501, %v2763
        %v2780 = vadd.f32 %v1502, %v2764
        %v2781 = vadd.f32 %v1503, %v2765
        %v2782 = vadd.f32 %v1504, %v2766
        %v2783 = vadd.f32 %v1505, %v2767
        %v2784 = vadd.f32 %v1506, %v2768
        %v2785 = vadd.f32 %v1507, %v2769
        %v2786 = vadd.f32 %v1508, %v2770
        %v2787 = vadd.f32 %v1509, %v2771
        %v2788 = vadd.f32 %v1510, %v2772
        %v2789 = vadd.f32 %v1511, %v2773
        %v2790 = vadd.f32 %v1512, %v2774
        %2791 = vst [vmem:[%s204] sm:$0xff] %v2775
        %2792 = vst [vmem:[%s204 + $0x8] sm:$0xff] %v2776
        %2793 = vst [vmem:[%s204 + $0x10] sm:$0xff] %v2777
        %2794 = vst [vmem:[%s204 + $0x18] sm:$0xff] %v2778
        %2795 = vst [vmem:[%s204 + $0x20] sm:$0xff] %v2779
        %2796 = vst [vmem:[%s204 + $0x28] sm:$0xff] %v2780
        %2797 = vst [vmem:[%s204 + $0x30] sm:$0xff] %v2781
        %2798 = vst [vmem:[%s204 + $0x38] sm:$0xff] %v2782
        %2799 = vst [vmem:[%s204 + $0x40] sm:$0xff] %v2783
        %2800 = vst [vmem:[%s204 + $0x48] sm:$0xff] %v2784
        %2801 = vst [vmem:[%s204 + $0x50] sm:$0xff] %v2785
        %2802 = vst [vmem:[%s204 + $0x58] sm:$0xff] %v2786
        %2803 = vst [vmem:[%s204 + $0x60] sm:$0xff] %v2787
        %2804 = vst [vmem:[%s204 + $0x68] sm:$0xff] %v2788
        %2805 = vst [vmem:[%s204 + $0x70] sm:$0xff] %v2789
        %2806 = vst [vmem:[%s204 + $0x78] sm:$0xff] %v2790
        %s2807 = sand.u32 %s97, 1
        %s2808 = scalar_lea.sflag [#allocation4], %s2807
        %s2809 = sand.u32 %s97, 1
        %s2810 = smul.addr %s2809, 128
        %s2811 = scalar_lea.vmem [#allocation7], %s2810
        // Predicated region
        $region41: #{fwd.1} parent=31 // pred_check
          %p2812 = pneg %p107
        $region42: #{fwd.1} parent=31 // pred_check_branch
          %2814 = sbr.rel (%p2812) target = $region44
        $region43: #{fwd.1} parent=31 // pred_region
          %s2815 = smul.u32 2, %s21
          %s2817 = ssub.s32 2048, 2048
          %2818 = vsyncadd %s2808, %s2817
          %s2819 = smul.addr %s2815, 8
          %s2820 = smul.addr %s2819, 128
          %s2821 = scalar_lea.hbm %s3, %s2820
          %s2822 = sshll.u32 %s2811, 4
          %s2823 = int_to_ptr.vmem [resolvable:$true] %s2822
          %2828 = dma.vmem_to_hbm [thread:$0]  %s2823, 2048, %s2821, %s2808, 128, 128, 8
        $region44: #{fwd.1} parent=31 // pred_fallthru
          _
      $region32: #{fwd.1} parent=5 // pred_fallthru
        _
      %p2829 = scmp.le.s32.totalorder 2, %s16
      // Predicated region
      $region45: #{fwd.1} parent=5 // pred_check
        %p2830 = pneg %p2829
      $region46: #{fwd.1} parent=5 // pred_check_branch
        %2832 = sbr.rel (%p2830) target = $region48
      $region47: #{fwd.1} parent=5 // pred_region
        %s2833 = ssub.s32 %s16, 2
        // Predicated region
        $region49: #{fwd.1} parent=47 // pred_check
          %p2834 = pneg %p113
        $region50: #{fwd.1} parent=47 // pred_check_branch
          %2836 = sbr.rel (%p2834) target = $region52
        $region51: #{fwd.1} parent=47 // pred_region
          %s2837 = sand.u32 %s98, 1
          %s2838 = scalar_lea.sflag [#allocation4], %s2837
          %s2839 = sand.u32 %s98, 1
          %s2840 = smul.addr %s2839, 128
          %s2841 = scalar_lea.vmem [#allocation7], %s2840
          %2842 = dma.done %s2838, 2048
        $region52: #{fwd.1} parent=47 // pred_fallthru
          _
      $region48: #{fwd.1} parent=5 // pred_fallthru
        _
    $region6: #{fwd.1} parent=1 // loop_footer
      %s20 = sadd.s32 1, %s16
    $region7: #{fwd.1} parent=1 // loop_footer_branch
      %15 = sbr.rel target = $region3
    $region8: #{fwd.1} parent=1 // loop_exit
      _
    %2843 = vsyncpa [#allocation3], 1
    %s2844 = scalar_lea.sflag [#allocation3], 1
    %2845 = vsyncpa %s2844, 1
    %2846 = vsyncpa [#allocation6], 1
    %2847 = vsyncpa [#allocation4], 1
    %s2848 = scalar_lea.sflag [#allocation4], 1
    %2849 = vsyncpa %s2848, 1

</llo_original>
